<compile_context>
chip_gen: v7x
topology: tpu7x:2x2x1
jax: 0.10.0
libtpu: 0.0.40
codegen_flags: <defaults>
</compile_context>

<pallas_src>
import math
import functools

import jax
import jax.numpy as jnp
from jax.experimental import pallas as pl
from jax.experimental.pallas import tpu as pltpu


def _layer_norm(v, gamma, beta, eps=1e-5):
    mu = jnp.mean(v, axis=-1, keepdims=True)
    var = jnp.mean((v - mu) ** 2, axis=-1, keepdims=True)
    return (v - mu) * jax.lax.rsqrt(var + eps) * gamma + beta


def encoder_layer_kernel(x_ref,
                         ln0_g_ref, ln0_b_ref, ln1_g_ref, ln1_b_ref,
                         wqkv_ref, bqkv_ref, wo_ref, bo_ref,
                         w1_ref, b1_ref, w2_ref, b2_ref,
                         out_ref,
                         *, n_heads: int, d_head: int, bb: int, seq: int, kv_chunk: int):
    D = n_heads * d_head
    R = bb * seq                      # rows in this block (bb batch elements x T tokens)
    BH = bb * n_heads

    # ---- hoisted parameter reads (one broadcast each) ----
    ln0_g = ln0_g_ref[...]
    ln0_b = ln0_b_ref[...]
    ln1_g = ln1_g_ref[...]
    ln1_b = ln1_b_ref[...]
    bqkv = bqkv_ref[...]
    bo = bo_ref[...]
    b1 = b1_ref[...]
    b2 = b2_ref[...]
    wqkv = wqkv_ref[...]              # bf16 (D, 3D)
    wo = wo_ref[...]                  # bf16 (D, D)
    w1 = w1_ref[...]                  # bf16 (D, 4D)
    w2 = w2_ref[...]                  # bf16 (4D, D)

    x = x_ref[...].astype(jnp.float32)            # (R, D)

    # ---- LayerNorm 0 (f32) ----
    xn = _layer_norm(x, ln0_g, ln0_b)

    # ---- fused QKV projection (bf16 MXU, f32 accumulate) ----
    qkv = jnp.dot(xn.astype(jnp.bfloat16), wqkv,
                  preferred_element_type=jnp.float32) + bqkv   # (R, 3D)

    scale = 1.0 / math.sqrt(d_head)
    q = qkv[:, 0:D] * scale           # fold scale into q (small tensor)
    k = qkv[:, D:2 * D]
    v = qkv[:, 2 * D:3 * D]

    # TODO(synk): reshape/transpose head shuffle materializes VMEM copies; restructure for big D.
    def to_heads(t):                  # (R, D) -> (bb*H, T, dh)
        t = t.reshape(bb, seq, n_heads, d_head)
        t = jnp.transpose(t, (0, 2, 1, 3))
        return t.reshape(BH, seq, d_head)

    qh = to_heads(q).astype(jnp.bfloat16)
    kh = to_heads(k).astype(jnp.bfloat16)
    vh = to_heads(v).astype(jnp.bfloat16)

    # ---- head-batched attention (scores/softmax in f32, normalization after PV) ----
    n_kv = seq // kv_chunk
    if n_kv == 1:
        s = jnp.einsum('bqd,bkd->bqk', qh, kh,
                       preferred_element_type=jnp.float32)     # (bb*H, T, T)
        p = jnp.exp(s - jnp.max(s, axis=-1, keepdims=True))
        l = jnp.sum(p, axis=-1, keepdims=True)
        ctx = jnp.einsum('bqk,bkd->bqd', p.astype(jnp.bfloat16), vh,
                         preferred_element_type=jnp.float32)   # (bb*H, T, dh)
        ctx = ctx / l                                          # exact, small tensor
    else:
        # KV-tiled online softmax: score footprint bounded to (bb*H, T, kv_chunk).
        m = jnp.full((BH, seq, 1), -jnp.inf, jnp.float32)
        l = jnp.zeros((BH, seq, 1), jnp.float32)
        ctx = jnp.zeros((BH, seq, d_head), jnp.float32)
        for c in range(n_kv):                                  # static unrolled loop
            ks = kh[:, c * kv_chunk:(c + 1) * kv_chunk, :]
            vs = vh[:, c * kv_chunk:(c + 1) * kv_chunk, :]
            s = jnp.einsum('bqd,bkd->bqk', qh, ks,
                           preferred_element_type=jnp.float32)
            m_new = jnp.maximum(m, jnp.max(s, axis=-1, keepdims=True))
            a = jnp.exp(m - m_new)
            p = jnp.exp(s - m_new)
            l = a * l + jnp.sum(p, axis=-1, keepdims=True)
            ctx = a * ctx + jnp.einsum('bqk,bkd->bqd', p.astype(jnp.bfloat16), vs,
                                       preferred_element_type=jnp.float32)
            m = m_new
        ctx = ctx / l

    attn = jnp.transpose(ctx.reshape(bb, n_heads, seq, d_head), (0, 2, 1, 3)).reshape(R, D)
    attn = jnp.dot(attn.astype(jnp.bfloat16), wo,
                   preferred_element_type=jnp.float32) + bo

    x1 = x + attn                     # residual (dropout_residual = identity in eval)

    # ---- LayerNorm 1 + FFN ----
    xn2 = _layer_norm(x1, ln1_g, ln1_b)
    h = jnp.dot(xn2.astype(jnp.bfloat16), w1,
                preferred_element_type=jnp.float32) + b1
    h = jnp.maximum(h, 0.0)           # ReLU (dropout_relu = identity)
    h = jnp.dot(h.astype(jnp.bfloat16), w2,
                preferred_element_type=jnp.float32) + b2

    out_ref[...] = (x1 + h).astype(out_ref.dtype)


def _vmem_budget():
    """Generation-aware slab / VMEM budgets (v7x has 64 MiB per TC vs 128 MiB on v5e/v6e)."""
    try:
        cap = int(getattr(pltpu.get_tpu_info(), "vmem_capacity_bytes", 128 << 20))
    except Exception:
        cap = 128 << 20
    if cap <= (64 << 20):
        rows_target, rows_cap = 256, 512
    else:
        rows_target, rows_cap = 512, 1024
    vmem_limit = max(32 << 20, min(cap * 3 // 4, 100 << 20))
    return rows_target, rows_cap, vmem_limit


def _pick_batch_block(B, T, rows_target, rows_cap):
    """Choose bb (batch elements per grid step): keep R = bb*T within budget, prefer grid >= 2."""
    valid = [bb for bb in range(1, B + 1)
             if B % bb == 0 and (bb == B or (bb * T) % 8 == 0)]
    capped = [bb for bb in valid if bb * T <= rows_cap]
    if not capped:
        capped = [min(valid, key=lambda bb: bb * T)]   # smallest legal slab if all exceed cap
    multi = [bb for bb in capped if B // bb >= 2] or capped   # keep both v7x TCs busy
    under = [bb for bb in multi if bb * T <= rows_target]
    return max(under) if under else min(multi)


def prepare_params(params):
    """One-time weight prep (hoisted out of the per-call path): fuse QKV, cast matmul
    weights to bf16. Biases and LN parameters stay f32."""
    return dict(
        ln0_g=params["ln0_g"], ln0_b=params["ln0_b"],
        ln1_g=params["ln1_g"], ln1_b=params["ln1_b"],
        wqkv=jnp.concatenate([params["wq"], params["wk"], params["wv"]],
                             axis=1).astype(jnp.bfloat16),
        bqkv=jnp.concatenate([params["bq"], params["bk"], params["bv"]], axis=1),
        wo=params["wo"].astype(jnp.bfloat16), bo=params["bo"],
        w1=params["w1"].astype(jnp.bfloat16), b1=params["b1"],
        w2=params["w2"].astype(jnp.bfloat16), b2=params["b2"],
    )


@functools.partial(jax.jit, static_argnames=("n_heads",))
def transformer_encoder_layer(x, prep, *, n_heads):
    """x: (B, T, D) float32. prep: output of prepare_params()."""
    B, T, D = x.shape
    d_head = D // n_heads
    d_ff = prep["w1"].shape[1]

    rows_target, rows_cap, vmem_limit = _vmem_budget()
    bb = _pick_batch_block(B, T, rows_target, rows_cap)
    R = bb * T
    grid = (B // bb,)

    # KV chunking only kicks in for non-trivial sequence lengths.
    kv_chunk = 256 if (T > 256 and T % 256 == 0) else T
    # TODO(synk): T > 256 not divisible by 256 falls back to the full score tensor.

    x2d = x.reshape(B * T, D)

    kernel = functools.partial(encoder_layer_kernel,
                               n_heads=n_heads, d_head=d_head, bb=bb, seq=T,
                               kv_chunk=kv_chunk)

    def const2d(r, c):
        # Block index never changes -> single-buffered (no VMEM wasted on a second copy).
        return pl.BlockSpec((r, c), lambda i: (0, 0), pipeline_mode=pl.Buffered(1))

    in_specs = [
        pl.BlockSpec((R, D), lambda i: (i, 0)),   # x slab: bb batch elems flattened to rows
        const2d(1, D), const2d(1, D),             # ln0_g, ln0_b
        const2d(1, D), const2d(1, D),             # ln1_g, ln1_b
        const2d(D, 3 * D), const2d(1, 3 * D),     # wqkv, bqkv
        const2d(D, D), const2d(1, D),             # wo, bo
        const2d(D, d_ff), const2d(1, d_ff),       # w1, b1
        const2d(d_ff, D), const2d(1, D),          # w2, b2
    ]
    out_spec = pl.BlockSpec((R, D), lambda i: (i, 0))

    fn = pl.pallas_call(
        kernel,
        out_shape=jax.ShapeDtypeStruct((B * T, D), x.dtype),
        grid_spec=pltpu.PrefetchScalarGridSpec(
            num_scalar_prefetch=0,
            grid=grid,
            in_specs=in_specs,
            out_specs=out_spec,
        ),
        compiler_params=pltpu.CompilerParams(
            dimension_semantics=("parallel",),
            vmem_limit_bytes=vmem_limit),
    )

    out2d = fn(
        x2d,
        prep["ln0_g"], prep["ln0_b"], prep["ln1_g"], prep["ln1_b"],
        prep["wqkv"], prep["bqkv"], prep["wo"], prep["bo"],
        prep["w1"], prep["b1"], prep["w2"], prep["b2"],
    )
    return out2d.reshape(B, T, D)


def init_params(key, d_model, n_heads):
    """Deterministic synthetic parameters. Linear weights stored as (in, out), f32."""
    d_ff = 4 * d_model
    keys = jax.random.split(key, 12)

    def w(k, shape, fan_in):
        bound = 1.0 / math.sqrt(fan_in)
        return jax.random.uniform(k, shape, jnp.float32, -bound, bound)

    return dict(
        ln0_g=jnp.ones((1, d_model), jnp.float32),
        ln0_b=jnp.zeros((1, d_model), jnp.float32),
        ln1_g=jnp.ones((1, d_model), jnp.float32),
        ln1_b=jnp.zeros((1, d_model), jnp.float32),
        wq=w(keys[0], (d_model, d_model), d_model),
        bq=w(keys[1], (1, d_model), d_model),
        wk=w(keys[2], (d_model, d_model), d_model),
        bk=w(keys[3], (1, d_model), d_model),
        wv=w(keys[4], (d_model, d_model), d_model),
        bv=w(keys[5], (1, d_model), d_model),
        wo=w(keys[6], (d_model, d_model), d_model),
        bo=w(keys[7], (1, d_model), d_model),
        w1=w(keys[8], (d_model, d_ff), d_model),
        b1=w(keys[9], (1, d_ff), d_model),
        w2=w(keys[10], (d_ff, d_model), d_ff),
        b2=w(keys[11], (1, d_model), d_ff),
    )


def reference_layer(x, params, *, n_heads):
    """Pure-JAX f32 reference (mirrors the PyTorch module's forward in eval mode)."""
    B, T, D = x.shape
    dh = D // n_heads

    def ln(v, g, b):
        mu = jnp.mean(v, -1, keepdims=True)
        var = jnp.mean((v - mu) ** 2, -1, keepdims=True)
        return (v - mu) * jax.lax.rsqrt(var + 1e-5) * g + b

    xn = ln(x, params["ln0_g"], params["ln0_b"])
    q = xn @ params["wq"] + params["bq"]
    k = xn @ params["wk"] + params["bk"]
    v = xn @ params["wv"] + params["bv"]
    qh = q.reshape(B, T, n_heads, dh).transpose(0, 2, 1, 3)
    kh = k.reshape(B, T, n_heads, dh).transpose(0, 2, 1, 3)
    vh = v.reshape(B, T, n_heads, dh).transpose(0, 2, 1, 3)
    s = jnp.einsum("bhqd,bhkd->bhqk", qh, kh) / math.sqrt(dh)
    p = jax.nn.softmax(s, axis=-1)
    a = jnp.einsum("bhqk,bhkd->bhqd", p, vh).transpose(0, 2, 1, 3).reshape(B, T, D)
    a = a @ params["wo"] + params["bo"]
    x1 = x + a
    xn2 = ln(x1, params["ln1_g"], params["ln1_b"])
    h = jnp.maximum(xn2 @ params["w1"] + params["b1"], 0.0)
    h = h @ params["w2"] + params["b2"]
    return x1 + h


if __name__ == "__main__":
    B, T, D, H = 2, 8, 32, 4   # small shapes: d_model=32 divisible by n_heads=4

    key = jax.random.PRNGKey(0)
    kx, kp = jax.random.split(key)
    x = jax.random.normal(kx, (B, T, D), jnp.float32)
    params = init_params(kp, D, H)
    prep = prepare_params(params)       # one-time: fuse QKV + bf16 weight cast

    out = transformer_encoder_layer(x, prep, n_heads=H)
    out = jax.block_until_ready(out)

    ref = reference_layer(x, params, n_heads=H)
    assert out.shape == (B, T, D)
    # bf16 matmul operands (f32 accumulation) vs f32 reference; softmax normalization is exact.
    max_err = float(jnp.max(jnp.abs(out - ref)))
    assert jnp.allclose(out, ref, atol=2e-2, rtol=2e-2), f"mismatch vs reference (max err {max_err})"

    print("KERNEL_OK")
</pallas_src>

<mosaic_0001>
module attributes {stable_mosaic.version = 11 : i64} {
  func.func @encoder_layer_kernel(%arg0: i32, %arg1: memref<8x32xf32, #tpu.memory_space<vmem>>, %arg2: memref<1x32xf32, #tpu.memory_space<vmem>>, %arg3: memref<1x32xf32, #tpu.memory_space<vmem>>, %arg4: memref<1x32xf32, #tpu.memory_space<vmem>>, %arg5: memref<1x32xf32, #tpu.memory_space<vmem>>, %arg6: memref<32x96xbf16, #tpu.memory_space<vmem>>, %arg7: memref<1x96xf32, #tpu.memory_space<vmem>>, %arg8: memref<32x32xbf16, #tpu.memory_space<vmem>>, %arg9: memref<1x32xf32, #tpu.memory_space<vmem>>, %arg10: memref<32x128xbf16, #tpu.memory_space<vmem>>, %arg11: memref<1x128xf32, #tpu.memory_space<vmem>>, %arg12: memref<128x32xbf16, #tpu.memory_space<vmem>>, %arg13: memref<1x32xf32, #tpu.memory_space<vmem>>, %arg14: memref<8x32xf32, #tpu.memory_space<vmem>>) attributes {dimension_semantics = [#tpu.dimension_semantics<parallel>], iteration_bounds = array<i64: 2>, scalar_prefetch = 0 : i64, scratch_operands = 0 : i64, tpu.core_type = #tpu.core_type<tc>, window_params = [{transform_indices = @transform_0, window_bounds = array<i64: 8, 32>}, {pipeline_mode = #tpu.pipeline_mode<synchronous>, transform_indices = @transform_1, window_bounds = array<i64: 1, 32>}, {pipeline_mode = #tpu.pipeline_mode<synchronous>, transform_indices = @transform_2, window_bounds = array<i64: 1, 32>}, {pipeline_mode = #tpu.pipeline_mode<synchronous>, transform_indices = @transform_3, window_bounds = array<i64: 1, 32>}, {pipeline_mode = #tpu.pipeline_mode<synchronous>, transform_indices = @transform_4, window_bounds = array<i64: 1, 32>}, {pipeline_mode = #tpu.pipeline_mode<synchronous>, transform_indices = @transform_5, window_bounds = array<i64: 32, 96>}, {pipeline_mode = #tpu.pipeline_mode<synchronous>, transform_indices = @transform_6, window_bounds = array<i64: 1, 96>}, {pipeline_mode = #tpu.pipeline_mode<synchronous>, transform_indices = @transform_7, window_bounds = array<i64: 32, 32>}, {pipeline_mode = #tpu.pipeline_mode<synchronous>, transform_indices = @transform_8, window_bounds = array<i64: 1, 32>}, {pipeline_mode = #tpu.pipeline_mode<synchronous>, transform_indices = @transform_9, window_bounds = array<i64: 32, 128>}, {pipeline_mode = #tpu.pipeline_mode<synchronous>, transform_indices = @transform_10, window_bounds = array<i64: 1, 128>}, {pipeline_mode = #tpu.pipeline_mode<synchronous>, transform_indices = @transform_11, window_bounds = array<i64: 128, 32>}, {pipeline_mode = #tpu.pipeline_mode<synchronous>, transform_indices = @transform_12, window_bounds = array<i64: 1, 32>}, {transform_indices = @transform_13, window_bounds = array<i64: 8, 32>}]} {
    %c0 = arith.constant 0 : index
    %c0_0 = arith.constant 0 : index
    %0 = vector.load %arg2[%c0, %c0_0] : memref<1x32xf32, #tpu.memory_space<vmem>>, vector<1x32xf32>
    %c0_1 = arith.constant 0 : index
    %c0_2 = arith.constant 0 : index
    %1 = vector.load %arg3[%c0_1, %c0_2] : memref<1x32xf32, #tpu.memory_space<vmem>>, vector<1x32xf32>
    %c0_3 = arith.constant 0 : index
    %c0_4 = arith.constant 0 : index
    %2 = vector.load %arg4[%c0_3, %c0_4] : memref<1x32xf32, #tpu.memory_space<vmem>>, vector<1x32xf32>
    %c0_5 = arith.constant 0 : index
    %c0_6 = arith.constant 0 : index
    %3 = vector.load %arg5[%c0_5, %c0_6] : memref<1x32xf32, #tpu.memory_space<vmem>>, vector<1x32xf32>
    %c0_7 = arith.constant 0 : index
    %c0_8 = arith.constant 0 : index
    %4 = vector.load %arg7[%c0_7, %c0_8] : memref<1x96xf32, #tpu.memory_space<vmem>>, vector<1x96xf32>
    %c0_9 = arith.constant 0 : index
    %c0_10 = arith.constant 0 : index
    %5 = vector.load %arg9[%c0_9, %c0_10] : memref<1x32xf32, #tpu.memory_space<vmem>>, vector<1x32xf32>
    %c0_11 = arith.constant 0 : index
    %c0_12 = arith.constant 0 : index
    %6 = vector.load %arg11[%c0_11, %c0_12] : memref<1x128xf32, #tpu.memory_space<vmem>>, vector<1x128xf32>
    %c0_13 = arith.constant 0 : index
    %c0_14 = arith.constant 0 : index
    %7 = vector.load %arg13[%c0_13, %c0_14] : memref<1x32xf32, #tpu.memory_space<vmem>>, vector<1x32xf32>
    %c0_15 = arith.constant 0 : index
    %c0_16 = arith.constant 0 : index
    %8 = vector.load %arg6[%c0_15, %c0_16] : memref<32x96xbf16, #tpu.memory_space<vmem>>, vector<32x96xbf16>
    %c0_17 = arith.constant 0 : index
    %c0_18 = arith.constant 0 : index
    %9 = vector.load %arg8[%c0_17, %c0_18] : memref<32x32xbf16, #tpu.memory_space<vmem>>, vector<32x32xbf16>
    %c0_19 = arith.constant 0 : index
    %c0_20 = arith.constant 0 : index
    %10 = vector.load %arg10[%c0_19, %c0_20] : memref<32x128xbf16, #tpu.memory_space<vmem>>, vector<32x128xbf16>
    %c0_21 = arith.constant 0 : index
    %c0_22 = arith.constant 0 : index
    %11 = vector.load %arg12[%c0_21, %c0_22] : memref<128x32xbf16, #tpu.memory_space<vmem>>, vector<128x32xbf16>
    %c0_23 = arith.constant 0 : index
    %c0_24 = arith.constant 0 : index
    %12 = vector.load %arg1[%c0_23, %c0_24] : memref<8x32xf32, #tpu.memory_space<vmem>>, vector<8x32xf32>
    %cst = arith.constant dense<0.000000e+00> : vector<8xf32>
    %13 = vector.multi_reduction <add>, %12, %cst [1] : vector<8x32xf32> to vector<8xf32>
    %14 = vector.shape_cast %13 : vector<8xf32> to vector<8x1xf32>
    %cst_25 = arith.constant 3.200000e+01 : f32
    %15 = vector.broadcast %cst_25 : f32 to vector<8x1xf32>
    %16 = arith.divf %14, %15 : vector<8x1xf32>
    %17 = vector.broadcast %16 : vector<8x1xf32> to vector<8x32xf32>
    %18 = arith.subf %12, %17 : vector<8x32xf32>
    %19 = arith.mulf %18, %18 : vector<8x32xf32>
    %cst_26 = arith.constant dense<0.000000e+00> : vector<8xf32>
    %20 = vector.multi_reduction <add>, %19, %cst_26 [1] : vector<8x32xf32> to vector<8xf32>
    %21 = vector.shape_cast %20 : vector<8xf32> to vector<8x1xf32>
    %cst_27 = arith.constant 3.200000e+01 : f32
    %22 = vector.broadcast %cst_27 : f32 to vector<8x1xf32>
    %23 = arith.divf %21, %22 : vector<8x1xf32>
    %24 = vector.broadcast %16 : vector<8x1xf32> to vector<8x32xf32>
    %25 = arith.subf %12, %24 : vector<8x32xf32>
    %cst_28 = arith.constant 9.99999974E-6 : f32
    %26 = vector.broadcast %cst_28 : f32 to vector<8x1xf32>
    %27 = arith.addf %23, %26 : vector<8x1xf32>
    %28 = math.rsqrt %27 : vector<8x1xf32>
    %29 = vector.broadcast %28 : vector<8x1xf32> to vector<8x32xf32>
    %30 = arith.mulf %25, %29 : vector<8x32xf32>
    %31 = vector.broadcast %0 : vector<1x32xf32> to vector<8x32xf32>
    %32 = arith.mulf %30, %31 : vector<8x32xf32>
    %33 = vector.broadcast %1 : vector<1x32xf32> to vector<8x32xf32>
    %34 = arith.addf %32, %33 : vector<8x32xf32>
    %35 = arith.truncf %34 : vector<8x32xf32> to vector<8x32xbf16>
    %cst_29 = arith.constant dense<0.000000e+00> : vector<8x96xf32>
    %36 = tpu.matmul %35, %8, %cst_29 {dimension_numbers = #tpu.dot_dimension_numbers<[1], [0], [0], [1], [0, 0, 1, 1], [], []>} : vector<8x32xbf16>, vector<32x96xbf16>, vector<8x96xf32> -> vector<8x96xf32>
    %37 = vector.broadcast %4 : vector<1x96xf32> to vector<8x96xf32>
    %38 = arith.addf %36, %37 : vector<8x96xf32>
    %39 = vector.extract_strided_slice %38 {offsets = [0, 0], sizes = [8, 32], strides = [1, 1]} : vector<8x96xf32> to vector<8x32xf32>
    %cst_30 = arith.constant 0.353553385 : f32
    %40 = vector.broadcast %cst_30 : f32 to vector<8x32xf32>
    %41 = arith.mulf %39, %40 : vector<8x32xf32>
    %42 = vector.extract_strided_slice %38 {offsets = [0, 32], sizes = [8, 32], strides = [1, 1]} : vector<8x96xf32> to vector<8x32xf32>
    %43 = vector.extract_strided_slice %38 {offsets = [0, 64], sizes = [8, 32], strides = [1, 1]} : vector<8x96xf32> to vector<8x32xf32>
    %44 = vector.shape_cast %41 : vector<8x32xf32> to vector<1x8x4x8xf32>
    %45 = tpu.transpose %44, [0, 2, 1, 3] : vector<1x8x4x8xf32> -> vector<1x4x8x8xf32>
    %46 = vector.shape_cast %45 : vector<1x4x8x8xf32> to vector<4x8x8xf32>
    %47 = arith.truncf %46 : vector<4x8x8xf32> to vector<4x8x8xbf16>
    %48 = vector.shape_cast %42 : vector<8x32xf32> to vector<1x8x4x8xf32>
    %49 = tpu.transpose %48, [0, 2, 1, 3] : vector<1x8x4x8xf32> -> vector<1x4x8x8xf32>
    %50 = vector.shape_cast %49 : vector<1x4x8x8xf32> to vector<4x8x8xf32>
    %51 = arith.truncf %50 : vector<4x8x8xf32> to vector<4x8x8xbf16>
    %52 = vector.shape_cast %43 : vector<8x32xf32> to vector<1x8x4x8xf32>
    %53 = tpu.transpose %52, [0, 2, 1, 3] : vector<1x8x4x8xf32> -> vector<1x4x8x8xf32>
    %54 = vector.shape_cast %53 : vector<1x4x8x8xf32> to vector<4x8x8xf32>
    %55 = arith.truncf %54 : vector<4x8x8xf32> to vector<4x8x8xbf16>
    "tpu.trace_start"() <{level = 10 : i32, message = "bqd,bkd->bqk"}> : () -> ()
    %cst_31 = arith.constant dense<0.000000e+00> : vector<4x8x8xf32>
    %56 = tpu.matmul %47, %51, %cst_31 {dimension_numbers = #tpu.dot_dimension_numbers<[2], [2], [1], [1], [0, 0, 0, 1, 1, 1], [0], [0]>} : vector<4x8x8xbf16>, vector<4x8x8xbf16>, vector<4x8x8xf32> -> vector<4x8x8xf32>
    "tpu.trace_stop"() : () -> ()
    %cst_32 = arith.constant dense<0xFF800000> : vector<4x8xf32>
    %57 = vector.multi_reduction <maximumf>, %56, %cst_32 [2] : vector<4x8x8xf32> to vector<4x8xf32>
    %58 = vector.shape_cast %57 : vector<4x8xf32> to vector<4x8x1xf32>
    %59 = vector.broadcast %58 : vector<4x8x1xf32> to vector<4x8x8xf32>
    %60 = arith.subf %56, %59 : vector<4x8x8xf32>
    %61 = math.exp %60 : vector<4x8x8xf32>
    %cst_33 = arith.constant dense<0.000000e+00> : vector<4x8xf32>
    %62 = vector.multi_reduction <add>, %61, %cst_33 [2] : vector<4x8x8xf32> to vector<4x8xf32>
    %63 = vector.shape_cast %62 : vector<4x8xf32> to vector<4x8x1xf32>
    %64 = arith.truncf %61 : vector<4x8x8xf32> to vector<4x8x8xbf16>
    "tpu.trace_start"() <{level = 10 : i32, message = "bqk,bkd->bqd"}> : () -> ()
    %cst_34 = arith.constant dense<0.000000e+00> : vector<4x8x8xf32>
    %65 = tpu.matmul %64, %55, %cst_34 {dimension_numbers = #tpu.dot_dimension_numbers<[2], [1], [1], [2], [0, 0, 0, 1, 1, 2], [0], [0]>} : vector<4x8x8xbf16>, vector<4x8x8xbf16>, vector<4x8x8xf32> -> vector<4x8x8xf32>
    "tpu.trace_stop"() : () -> ()
    %66 = vector.broadcast %63 : vector<4x8x1xf32> to vector<4x8x8xf32>
    %67 = arith.divf %65, %66 : vector<4x8x8xf32>
    %68 = vector.shape_cast %67 : vector<4x8x8xf32> to vector<1x4x8x8xf32>
    %69 = tpu.transpose %68, [0, 2, 1, 3] : vector<1x4x8x8xf32> -> vector<1x8x4x8xf32>
    %70 = vector.shape_cast %69 : vector<1x8x4x8xf32> to vector<8x32xf32>
    %71 = arith.truncf %70 : vector<8x32xf32> to vector<8x32xbf16>
    %cst_35 = arith.constant dense<0.000000e+00> : vector<8x32xf32>
    %72 = tpu.matmul %71, %9, %cst_35 {dimension_numbers = #tpu.dot_dimension_numbers<[1], [0], [0], [1], [0, 0, 1, 1], [], []>} : vector<8x32xbf16>, vector<32x32xbf16>, vector<8x32xf32> -> vector<8x32xf32>
    %73 = vector.broadcast %5 : vector<1x32xf32> to vector<8x32xf32>
    %74 = arith.addf %72, %73 : vector<8x32xf32>
    %75 = arith.addf %12, %74 : vector<8x32xf32>
    %cst_36 = arith.constant dense<0.000000e+00> : vector<8xf32>
    %76 = vector.multi_reduction <add>, %75, %cst_36 [1] : vector<8x32xf32> to vector<8xf32>
    %77 = vector.shape_cast %76 : vector<8xf32> to vector<8x1xf32>
    %cst_37 = arith.constant 3.200000e+01 : f32
    %78 = vector.broadcast %cst_37 : f32 to vector<8x1xf32>
    %79 = arith.divf %77, %78 : vector<8x1xf32>
    %80 = vector.broadcast %79 : vector<8x1xf32> to vector<8x32xf32>
    %81 = arith.subf %75, %80 : vector<8x32xf32>
    %82 = arith.mulf %81, %81 : vector<8x32xf32>
    %cst_38 = arith.constant dense<0.000000e+00> : vector<8xf32>
    %83 = vector.multi_reduction <add>, %82, %cst_38 [1] : vector<8x32xf32> to vector<8xf32>
    %84 = vector.shape_cast %83 : vector<8xf32> to vector<8x1xf32>
    %cst_39 = arith.constant 3.200000e+01 : f32
    %85 = vector.broadcast %cst_39 : f32 to vector<8x1xf32>
    %86 = arith.divf %84, %85 : vector<8x1xf32>
    %87 = vector.broadcast %79 : vector<8x1xf32> to vector<8x32xf32>
    %88 = arith.subf %75, %87 : vector<8x32xf32>
    %cst_40 = arith.constant 9.99999974E-6 : f32
    %89 = vector.broadcast %cst_40 : f32 to vector<8x1xf32>
    %90 = arith.addf %86, %89 : vector<8x1xf32>
    %91 = math.rsqrt %90 : vector<8x1xf32>
    %92 = vector.broadcast %91 : vector<8x1xf32> to vector<8x32xf32>
    %93 = arith.mulf %88, %92 : vector<8x32xf32>
    %94 = vector.broadcast %2 : vector<1x32xf32> to vector<8x32xf32>
    %95 = arith.mulf %93, %94 : vector<8x32xf32>
    %96 = vector.broadcast %3 : vector<1x32xf32> to vector<8x32xf32>
    %97 = arith.addf %95, %96 : vector<8x32xf32>
    %98 = arith.truncf %97 : vector<8x32xf32> to vector<8x32xbf16>
    %cst_41 = arith.constant dense<0.000000e+00> : vector<8x128xf32>
    %99 = tpu.matmul %98, %10, %cst_41 {dimension_numbers = #tpu.dot_dimension_numbers<[1], [0], [0], [1], [0, 0, 1, 1], [], []>} : vector<8x32xbf16>, vector<32x128xbf16>, vector<8x128xf32> -> vector<8x128xf32>
    %100 = vector.broadcast %6 : vector<1x128xf32> to vector<8x128xf32>
    %101 = arith.addf %99, %100 : vector<8x128xf32>
    %cst_42 = arith.constant 0.000000e+00 : f32
    %102 = vector.broadcast %cst_42 : f32 to vector<8x128xf32>
    %103 = arith.maximumf %101, %102 : vector<8x128xf32>
    %104 = arith.truncf %103 : vector<8x128xf32> to vector<8x128xbf16>
    %cst_43 = arith.constant dense<0.000000e+00> : vector<8x32xf32>
    %105 = tpu.matmul %104, %11, %cst_43 {dimension_numbers = #tpu.dot_dimension_numbers<[1], [0], [0], [1], [0, 0, 1, 1], [], []>} : vector<8x128xbf16>, vector<128x32xbf16>, vector<8x32xf32> -> vector<8x32xf32>
    %106 = vector.broadcast %7 : vector<1x32xf32> to vector<8x32xf32>
    %107 = arith.addf %105, %106 : vector<8x32xf32>
    %108 = arith.addf %75, %107 : vector<8x32xf32>
    %c0_44 = arith.constant 0 : index
    %c0_45 = arith.constant 0 : index
    %109 = vector.load %arg14[%c0_44, %c0_45] : memref<8x32xf32, #tpu.memory_space<vmem>>, vector<8x32xf32>
    tpu.vector_store %arg14[%c0_44, %c0_45], %108 {strides = array<i32>} : memref<8x32xf32, #tpu.memory_space<vmem>>, vector<8x32xf32>,
    return
  }
  func.func @transform_0(%arg0: i32) -> (i32, i32) {
    %c0_i32 = arith.constant 0 : i32
    %c0_i32_0 = arith.constant 0 : i32
    return %arg0, %c0_i32 : i32, i32
  }
  func.func @transform_1(%arg0: i32) -> (i32, i32) {
    %c0_i32 = arith.constant 0 : i32
    %c0_i32_0 = arith.constant 0 : i32
    %c0_i32_1 = arith.constant 0 : i32
    return %c0_i32, %c0_i32_0 : i32, i32
  }
  func.func @transform_2(%arg0: i32) -> (i32, i32) {
    %c0_i32 = arith.constant 0 : i32
    %c0_i32_0 = arith.constant 0 : i32
    %c0_i32_1 = arith.constant 0 : i32
    return %c0_i32, %c0_i32_0 : i32, i32
  }
  func.func @transform_3(%arg0: i32) -> (i32, i32) {
    %c0_i32 = arith.constant 0 : i32
    %c0_i32_0 = arith.constant 0 : i32
    %c0_i32_1 = arith.constant 0 : i32
    return %c0_i32, %c0_i32_0 : i32, i32
  }
  func.func @transform_4(%arg0: i32) -> (i32, i32) {
    %c0_i32 = arith.constant 0 : i32
    %c0_i32_0 = arith.constant 0 : i32
    %c0_i32_1 = arith.constant 0 : i32
    return %c0_i32, %c0_i32_0 : i32, i32
  }
  func.func @transform_5(%arg0: i32) -> (i32, i32) {
    %c0_i32 = arith.constant 0 : i32
    %c0_i32_0 = arith.constant 0 : i32
    %c0_i32_1 = arith.constant 0 : i32
    return %c0_i32, %c0_i32_0 : i32, i32
  }
  func.func @transform_6(%arg0: i32) -> (i32, i32) {
    %c0_i32 = arith.constant 0 : i32
    %c0_i32_0 = arith.constant 0 : i32
    %c0_i32_1 = arith.constant 0 : i32
    return %c0_i32, %c0_i32_0 : i32, i32
  }
  func.func @transform_7(%arg0: i32) -> (i32, i32) {
    %c0_i32 = arith.constant 0 : i32
    %c0_i32_0 = arith.constant 0 : i32
    %c0_i32_1 = arith.constant 0 : i32
    return %c0_i32, %c0_i32_0 : i32, i32
  }
  func.func @transform_8(%arg0: i32) -> (i32, i32) {
    %c0_i32 = arith.constant 0 : i32
    %c0_i32_0 = arith.constant 0 : i32
    %c0_i32_1 = arith.constant 0 : i32
    return %c0_i32, %c0_i32_0 : i32, i32
  }
  func.func @transform_9(%arg0: i32) -> (i32, i32) {
    %c0_i32 = arith.constant 0 : i32
    %c0_i32_0 = arith.constant 0 : i32
    %c0_i32_1 = arith.constant 0 : i32
    return %c0_i32, %c0_i32_0 : i32, i32
  }
  func.func @transform_10(%arg0: i32) -> (i32, i32) {
    %c0_i32 = arith.constant 0 : i32
    %c0_i32_0 = arith.constant 0 : i32
    %c0_i32_1 = arith.constant 0 : i32
    return %c0_i32, %c0_i32_0 : i32, i32
  }
  func.func @transform_11(%arg0: i32) -> (i32, i32) {
    %c0_i32 = arith.constant 0 : i32
    %c0_i32_0 = arith.constant 0 : i32
    %c0_i32_1 = arith.constant 0 : i32
    return %c0_i32, %c0_i32_0 : i32, i32
  }
  func.func @transform_12(%arg0: i32) -> (i32, i32) {
    %c0_i32 = arith.constant 0 : i32
    %c0_i32_0 = arith.constant 0 : i32
    %c0_i32_1 = arith.constant 0 : i32
    return %c0_i32, %c0_i32_0 : i32, i32
  }
  func.func @transform_13(%arg0: i32) -> (i32, i32) {
    %c0_i32 = arith.constant 0 : i32
    %c0_i32_0 = arith.constant 0 : i32
    return %arg0, %c0_i32 : i32, i32
  }
}

</mosaic_0001>

<llo_original>
// kernel: transformer_encoder_layer.1
$region0: #{transformer_encoder_layer.1}
  #allocation0 [shape = 'u32[]', space=smem, size = 0x4, offset = 0x4, fixed_abs, tag = 'smem constant byte address 0x4 - core index']
  #allocation1 [shape = 'u32[144,128]{1,0:T(1,128)}', space=vmem, size = 0x12000, scoped, tag = 'internal scratch']
  %s0 = inlined_call_operand.hbm [shape: f32[16,32], index: 0, kind: input, shape index: {}]
  %s1 = inlined_call_operand.hbm [shape: f32[1,32], index: 1, kind: input, shape index: {}]
  %s2 = inlined_call_operand.hbm [shape: f32[1,32], index: 2, kind: input, shape index: {}]
  %s3 = inlined_call_operand.hbm [shape: f32[1,32], index: 3, kind: input, shape index: {}]
  %s4 = inlined_call_operand.hbm [shape: f32[1,32], index: 4, kind: input, shape index: {}]
  %s5 = inlined_call_operand.hbm [shape: bf16[32,96], index: 5, kind: input, shape index: {}]
  %s6 = inlined_call_operand.hbm [shape: f32[1,96], index: 6, kind: input, shape index: {}]
  %s7 = inlined_call_operand.hbm [shape: bf16[32,32], index: 7, kind: input, shape index: {}]
  %s8 = inlined_call_operand.hbm [shape: f32[1,32], index: 8, kind: input, shape index: {}]
  %s9 = inlined_call_operand.hbm [shape: bf16[32,128], index: 9, kind: input, shape index: {}]
  %s10 = inlined_call_operand.hbm [shape: f32[1,128], index: 10, kind: input, shape index: {}]
  %s11 = inlined_call_operand.hbm [shape: bf16[128,32], index: 11, kind: input, shape index: {}]
  %s12 = inlined_call_operand.hbm [shape: f32[1,32], index: 12, kind: input, shape index: {}]
  %s13 = inlined_call_operand.hbm [shape: f32[16,32], index: 13, kind: output, shape index: {}]
  %s14 = sld [smem:[#allocation0]]
  $region137: #{transformer_encoder_layer.1} parent=0
    _
  %s16 = ssub.s32 1, %s14
  %s17 = scalar_select 0, %s16, %s14
  $region1: #{transformer_encoder_layer.1} parent=0
    #allocation2 [shape = 'u8[8192]{0}', space=vmem, size = 0x2000, scoped, tag = 'input window, operand 0']
    #allocation3 [shape = 's32[2]{0}', space=sflag, size = 0x8, scoped, tag = 'scoped memory for transformer_encoder_layer.1']
    #allocation4 [shape = 's32[2]{0}', space=sflag, size = 0x8, scoped, tag = 'scoped memory for transformer_encoder_layer.1']
    #allocation5 [shape = 'u8[512]{0}', space=vmem, size = 0x400, scoped, tag = 'input window, operand 1, single buffered']
    #allocation6 [shape = 's32[1]{0}', space=sflag, size = 0x4, scoped, tag = 'scoped memory for transformer_encoder_layer.1']
    #allocation7 [shape = 'u8[512]{0}', space=vmem, size = 0x400, scoped, tag = 'input window, operand 2, single buffered']
    #allocation8 [shape = 'u8[512]{0}', space=vmem, size = 0x400, scoped, tag = 'input window, operand 3, single buffered']
    #allocation9 [shape = 's32[1]{0}', space=sflag, size = 0x4, scoped, tag = 'scoped memory for transformer_encoder_layer.1']
    #allocation10 [shape = 'u8[512]{0}', space=vmem, size = 0x400, scoped, tag = 'input window, operand 4, single buffered']
    #allocation11 [shape = 'u8[8192]{0}', space=vmem, size = 0x2000, scoped, tag = 'input window, operand 5, single buffered']
    #allocation12 [shape = 's32[1]{0}', space=sflag, size = 0x4, scoped, tag = 'scoped memory for transformer_encoder_layer.1']
    #allocation13 [shape = 'u8[512]{0}', space=vmem, size = 0x400, scoped, tag = 'input window, operand 6, single buffered']
    #allocation14 [shape = 'u8[8192]{0}', space=vmem, size = 0x2000, scoped, tag = 'input window, operand 7, single buffered']
    #allocation15 [shape = 's32[1]{0}', space=sflag, size = 0x4, scoped, tag = 'scoped memory for transformer_encoder_layer.1']
    #allocation16 [shape = 'u8[512]{0}', space=vmem, size = 0x400, scoped, tag = 'input window, operand 8, single buffered']
    #allocation17 [shape = 'u8[8192]{0}', space=vmem, size = 0x2000, scoped, tag = 'input window, operand 9, single buffered']
    #allocation18 [shape = 's32[1]{0}', space=sflag, size = 0x4, scoped, tag = 'scoped memory for transformer_encoder_layer.1']
    #allocation19 [shape = 'u8[512]{0}', space=vmem, size = 0x400, scoped, tag = 'input window, operand 10, single buffered']
    #allocation20 [shape = 'u8[32768]{0}', space=vmem, size = 0x8000, scoped, tag = 'input window, operand 11, single buffered']
    #allocation21 [shape = 's32[1]{0}', space=sflag, size = 0x4, scoped, tag = 'scoped memory for transformer_encoder_layer.1']
    #allocation22 [shape = 'u8[512]{0}', space=vmem, size = 0x400, scoped, tag = 'input window, operand 12, single buffered']
    #allocation23 [shape = 'u8[8192]{0}', space=vmem, size = 0x2000, scoped, tag = 'output window, operand 0']
    %18 = vsyncpa [#allocation3], 0
    %s19 = scalar_lea.sflag [#allocation3], 1
    %20 = vsyncpa %s19, 0
    %21 = vsyncpa [#allocation6], 0
    %22 = vsyncpa [#allocation9], 0
    %23 = vsyncpa [#allocation12], 0
    %24 = vsyncpa [#allocation15], 0
    %25 = vsyncpa [#allocation18], 0
    %26 = vsyncpa [#allocation21], 0
    %27 = vsyncpa [#allocation4], 0
    %s28 = scalar_lea.sflag [#allocation4], 1
    %29 = vsyncpa %s28, 0
    loop: start=0, step=1, limit=4
    $region2: #{transformer_encoder_layer.1} parent=1 // loop_pre_header
      _
    $region3: #{transformer_encoder_layer.1} parent=1 // loop_header
      %s31 = sphi 0, %s35
      %p32 = scmp.ge.s32.totalorder %s31, 4
      %s41 = sphi 0, %s43
      %s44 = sphi 0, %s41
      %s45 = sphi 0, %s44
      %s61 = sphi 0, %s45
      %s65 = sphi 0, %s65
      %s67 = sphi 0, %s65
      %s68 = sphi 0, %s67
      %s82 = sphi 0, %s68
      %s86 = sphi 0, %s86
      %s88 = sphi 0, %s86
      %s89 = sphi 0, %s88
      %s103 = sphi 0, %s89
      %s107 = sphi 0, %s107
      %s109 = sphi 0, %s107
      %s110 = sphi 0, %s109
      %s124 = sphi 0, %s110
      %s128 = sphi 0, %s128
      %s130 = sphi 0, %s128
      %s131 = sphi 0, %s130
      %s145 = sphi 0, %s131
      %s149 = sphi 0, %s149
      %s151 = sphi 0, %s149
      %s152 = sphi 0, %s151
      %s166 = sphi 0, %s152
      %s170 = sphi 0, %s170
      %s172 = sphi 0, %s170
      %s173 = sphi 0, %s172
      %s187 = sphi 0, %s173
      %s191 = sphi 0, %s191
      %s193 = sphi 0, %s191
      %s194 = sphi 0, %s193
      %s208 = sphi 0, %s194
      %s212 = sphi 0, %s212
      %s214 = sphi 0, %s212
      %s215 = sphi 0, %s214
      %s229 = sphi 0, %s215
      %s233 = sphi 0, %s233
      %s235 = sphi 0, %s233
      %s236 = sphi 0, %s235
      %s250 = sphi 0, %s236
      %s254 = sphi 0, %s254
      %s256 = sphi 0, %s254
      %s257 = sphi 0, %s256
      %s271 = sphi 0, %s257
      %s275 = sphi 0, %s275
      %s277 = sphi 0, %s275
      %s278 = sphi 0, %s277
      %s292 = sphi 0, %s278
      %s296 = sphi 0, %s296
      %s298 = sphi 0, %s296
      %s299 = sphi 0, %s298
      %s313 = sphi 0, %s299
      %s319 = sphi 0, %s321
      %s322 = sphi 0, %s319
      %s323 = sphi 0, %s322
      %s339 = sphi 0, %s323
    $region4: #{transformer_encoder_layer.1} parent=1 // loop_header_branch
      %34 = sbr.rel (%p32) target = $region8
    $region5: #{transformer_encoder_layer.1} parent=1 // loop_body
      %s36 = ssub.s32 %s31, 1
      %s37 = ssub.s32 %s31, 2
      %s38 = sadd.s32 %s31, 1
      %s39 = ssub.s32 %s31, %s38
      %p40 = scmp.eq.s32.totalorder %s39, 0
      %s42 = sadd.s32 %s41, 1
      %s43 = scalar_select %p40, %s41, %s42
      %p46 = pneg %p40
      %p47 = scmp.eq.s32.totalorder %s31, 1
      %p48 = por %p46, %p47
      %p49 = scmp.ne.s32.totalorder %s41, %s44
      %p50 = scmp.eq.s32.totalorder %s31, 0
      %p51 = por %p49, %p50
      %p52 = scmp.ne.s32.totalorder %s41, %s44
      %p53 = scmp.eq.s32.totalorder %s36, 1
      %p54 = por %p52, %p53
      %p55 = scmp.ne.s32.totalorder %s44, %s45
      %p56 = scmp.eq.s32.totalorder %s36, 0
      %p57 = por %p55, %p56
      %p58 = scmp.ne.s32.totalorder %s44, %s45
      %p59 = scmp.eq.s32.totalorder %s37, 1
      %p60 = por %p58, %p59
      %p62 = scmp.ne.s32.totalorder %s45, %s61
      %p63 = scmp.eq.s32.totalorder %s37, 0
      %p64 = por %p62, %p63
      %s66 = sadd.s32 %s65, 1
      %p69 = scmp.eq.s32.totalorder %s31, 1
      %p70 = scmp.ne.s32.totalorder %s65, %s67
      %p71 = scmp.eq.s32.totalorder %s31, 0
      %p72 = por %p70, %p71
      %p73 = scmp.ne.s32.totalorder %s65, %s67
      %p74 = scmp.eq.s32.totalorder %s36, 1
      %p75 = por %p73, %p74
      %p76 = scmp.ne.s32.totalorder %s67, %s68
      %p77 = scmp.eq.s32.totalorder %s36, 0
      %p78 = por %p76, %p77
      %p79 = scmp.ne.s32.totalorder %s67, %s68
      %p80 = scmp.eq.s32.totalorder %s37, 1
      %p81 = por %p79, %p80
      %p83 = scmp.ne.s32.totalorder %s68, %s82
      %p84 = scmp.eq.s32.totalorder %s37, 0
      %p85 = por %p83, %p84
      %s87 = sadd.s32 %s86, 1
      %p90 = scmp.eq.s32.totalorder %s31, 1
      %p91 = scmp.ne.s32.totalorder %s86, %s88
      %p92 = scmp.eq.s32.totalorder %s31, 0
      %p93 = por %p91, %p92
      %p94 = scmp.ne.s32.totalorder %s86, %s88
      %p95 = scmp.eq.s32.totalorder %s36, 1
      %p96 = por %p94, %p95
      %p97 = scmp.ne.s32.totalorder %s88, %s89
      %p98 = scmp.eq.s32.totalorder %s36, 0
      %p99 = por %p97, %p98
      %p100 = scmp.ne.s32.totalorder %s88, %s89
      %p101 = scmp.eq.s32.totalorder %s37, 1
      %p102 = por %p100, %p101
      %p104 = scmp.ne.s32.totalorder %s89, %s103
      %p105 = scmp.eq.s32.totalorder %s37, 0
      %p106 = por %p104, %p105
      %s108 = sadd.s32 %s107, 1
      %p111 = scmp.eq.s32.totalorder %s31, 1
      %p112 = scmp.ne.s32.totalorder %s107, %s109
      %p113 = scmp.eq.s32.totalorder %s31, 0
      %p114 = por %p112, %p113
      %p115 = scmp.ne.s32.totalorder %s107, %s109
      %p116 = scmp.eq.s32.totalorder %s36, 1
      %p117 = por %p115, %p116
      %p118 = scmp.ne.s32.totalorder %s109, %s110
      %p119 = scmp.eq.s32.totalorder %s36, 0
      %p120 = por %p118, %p119
      %p121 = scmp.ne.s32.totalorder %s109, %s110
      %p122 = scmp.eq.s32.totalorder %s37, 1
      %p123 = por %p121, %p122
      %p125 = scmp.ne.s32.totalorder %s110, %s124
      %p126 = scmp.eq.s32.totalorder %s37, 0
      %p127 = por %p125, %p126
      %s129 = sadd.s32 %s128, 1
      %p132 = scmp.eq.s32.totalorder %s31, 1
      %p133 = scmp.ne.s32.totalorder %s128, %s130
      %p134 = scmp.eq.s32.totalorder %s31, 0
      %p135 = por %p133, %p134
      %p136 = scmp.ne.s32.totalorder %s128, %s130
      %p137 = scmp.eq.s32.totalorder %s36, 1
      %p138 = por %p136, %p137
      %p139 = scmp.ne.s32.totalorder %s130, %s131
      %p140 = scmp.eq.s32.totalorder %s36, 0
      %p141 = por %p139, %p140
      %p142 = scmp.ne.s32.totalorder %s130, %s131
      %p143 = scmp.eq.s32.totalorder %s37, 1
      %p144 = por %p142, %p143
      %p146 = scmp.ne.s32.totalorder %s131, %s145
      %p147 = scmp.eq.s32.totalorder %s37, 0
      %p148 = por %p146, %p147
      %s150 = sadd.s32 %s149, 1
      %p153 = scmp.eq.s32.totalorder %s31, 1
      %p154 = scmp.ne.s32.totalorder %s149, %s151
      %p155 = scmp.eq.s32.totalorder %s31, 0
      %p156 = por %p154, %p155
      %p157 = scmp.ne.s32.totalorder %s149, %s151
      %p158 = scmp.eq.s32.totalorder %s36, 1
      %p159 = por %p157, %p158
      %p160 = scmp.ne.s32.totalorder %s151, %s152
      %p161 = scmp.eq.s32.totalorder %s36, 0
      %p162 = por %p160, %p161
      %p163 = scmp.ne.s32.totalorder %s151, %s152
      %p164 = scmp.eq.s32.totalorder %s37, 1
      %p165 = por %p163, %p164
      %p167 = scmp.ne.s32.totalorder %s152, %s166
      %p168 = scmp.eq.s32.totalorder %s37, 0
      %p169 = por %p167, %p168
      %s171 = sadd.s32 %s170, 1
      %p174 = scmp.eq.s32.totalorder %s31, 1
      %p175 = scmp.ne.s32.totalorder %s170, %s172
      %p176 = scmp.eq.s32.totalorder %s31, 0
      %p177 = por %p175, %p176
      %p178 = scmp.ne.s32.totalorder %s170, %s172
      %p179 = scmp.eq.s32.totalorder %s36, 1
      %p180 = por %p178, %p179
      %p181 = scmp.ne.s32.totalorder %s172, %s173
      %p182 = scmp.eq.s32.totalorder %s36, 0
      %p183 = por %p181, %p182
      %p184 = scmp.ne.s32.totalorder %s172, %s173
      %p185 = scmp.eq.s32.totalorder %s37, 1
      %p186 = por %p184, %p185
      %p188 = scmp.ne.s32.totalorder %s173, %s187
      %p189 = scmp.eq.s32.totalorder %s37, 0
      %p190 = por %p188, %p189
      %s192 = sadd.s32 %s191, 1
      %p195 = scmp.eq.s32.totalorder %s31, 1
      %p196 = scmp.ne.s32.totalorder %s191, %s193
      %p197 = scmp.eq.s32.totalorder %s31, 0
      %p198 = por %p196, %p197
      %p199 = scmp.ne.s32.totalorder %s191, %s193
      %p200 = scmp.eq.s32.totalorder %s36, 1
      %p201 = por %p199, %p200
      %p202 = scmp.ne.s32.totalorder %s193, %s194
      %p203 = scmp.eq.s32.totalorder %s36, 0
      %p204 = por %p202, %p203
      %p205 = scmp.ne.s32.totalorder %s193, %s194
      %p206 = scmp.eq.s32.totalorder %s37, 1
      %p207 = por %p205, %p206
      %p209 = scmp.ne.s32.totalorder %s194, %s208
      %p210 = scmp.eq.s32.totalorder %s37, 0
      %p211 = por %p209, %p210
      %s213 = sadd.s32 %s212, 1
      %p216 = scmp.eq.s32.totalorder %s31, 1
      %p217 = scmp.ne.s32.totalorder %s212, %s214
      %p218 = scmp.eq.s32.totalorder %s31, 0
      %p219 = por %p217, %p218
      %p220 = scmp.ne.s32.totalorder %s212, %s214
      %p221 = scmp.eq.s32.totalorder %s36, 1
      %p222 = por %p220, %p221
      %p223 = scmp.ne.s32.totalorder %s214, %s215
      %p224 = scmp.eq.s32.totalorder %s36, 0
      %p225 = por %p223, %p224
      %p226 = scmp.ne.s32.totalorder %s214, %s215
      %p227 = scmp.eq.s32.totalorder %s37, 1
      %p228 = por %p226, %p227
      %p230 = scmp.ne.s32.totalorder %s215, %s229
      %p231 = scmp.eq.s32.totalorder %s37, 0
      %p232 = por %p230, %p231
      %s234 = sadd.s32 %s233, 1
      %p237 = scmp.eq.s32.totalorder %s31, 1
      %p238 = scmp.ne.s32.totalorder %s233, %s235
      %p239 = scmp.eq.s32.totalorder %s31, 0
      %p240 = por %p238, %p239
      %p241 = scmp.ne.s32.totalorder %s233, %s235
      %p242 = scmp.eq.s32.totalorder %s36, 1
      %p243 = por %p241, %p242
      %p244 = scmp.ne.s32.totalorder %s235, %s236
      %p245 = scmp.eq.s32.totalorder %s36, 0
      %p246 = por %p244, %p245
      %p247 = scmp.ne.s32.totalorder %s235, %s236
      %p248 = scmp.eq.s32.totalorder %s37, 1
      %p249 = por %p247, %p248
      %p251 = scmp.ne.s32.totalorder %s236, %s250
      %p252 = scmp.eq.s32.totalorder %s37, 0
      %p253 = por %p251, %p252
      %s255 = sadd.s32 %s254, 1
      %p258 = scmp.eq.s32.totalorder %s31, 1
      %p259 = scmp.ne.s32.totalorder %s254, %s256
      %p260 = scmp.eq.s32.totalorder %s31, 0
      %p261 = por %p259, %p260
      %p262 = scmp.ne.s32.totalorder %s254, %s256
      %p263 = scmp.eq.s32.totalorder %s36, 1
      %p264 = por %p262, %p263
      %p265 = scmp.ne.s32.totalorder %s256, %s257
      %p266 = scmp.eq.s32.totalorder %s36, 0
      %p267 = por %p265, %p266
      %p268 = scmp.ne.s32.totalorder %s256, %s257
      %p269 = scmp.eq.s32.totalorder %s37, 1
      %p270 = por %p268, %p269
      %p272 = scmp.ne.s32.totalorder %s257, %s271
      %p273 = scmp.eq.s32.totalorder %s37, 0
      %p274 = por %p272, %p273
      %s276 = sadd.s32 %s275, 1
      %p279 = scmp.eq.s32.totalorder %s31, 1
      %p280 = scmp.ne.s32.totalorder %s275, %s277
      %p281 = scmp.eq.s32.totalorder %s31, 0
      %p282 = por %p280, %p281
      %p283 = scmp.ne.s32.totalorder %s275, %s277
      %p284 = scmp.eq.s32.totalorder %s36, 1
      %p285 = por %p283, %p284
      %p286 = scmp.ne.s32.totalorder %s277, %s278
      %p287 = scmp.eq.s32.totalorder %s36, 0
      %p288 = por %p286, %p287
      %p289 = scmp.ne.s32.totalorder %s277, %s278
      %p290 = scmp.eq.s32.totalorder %s37, 1
      %p291 = por %p289, %p290
      %p293 = scmp.ne.s32.totalorder %s278, %s292
      %p294 = scmp.eq.s32.totalorder %s37, 0
      %p295 = por %p293, %p294
      %s297 = sadd.s32 %s296, 1
      %p300 = scmp.eq.s32.totalorder %s31, 1
      %p301 = scmp.ne.s32.totalorder %s296, %s298
      %p302 = scmp.eq.s32.totalorder %s31, 0
      %p303 = por %p301, %p302
      %p304 = scmp.ne.s32.totalorder %s296, %s298
      %p305 = scmp.eq.s32.totalorder %s36, 1
      %p306 = por %p304, %p305
      %p307 = scmp.ne.s32.totalorder %s298, %s299
      %p308 = scmp.eq.s32.totalorder %s36, 0
      %p309 = por %p307, %p308
      %p310 = scmp.ne.s32.totalorder %s298, %s299
      %p311 = scmp.eq.s32.totalorder %s37, 1
      %p312 = por %p310, %p311
      %p314 = scmp.ne.s32.totalorder %s299, %s313
      %p315 = scmp.eq.s32.totalorder %s37, 0
      %p316 = por %p314, %p315
      %s317 = ssub.s32 %s31, %s38
      %p318 = scmp.eq.s32.totalorder %s317, 0
      %s320 = sadd.s32 %s319, 1
      %s321 = scalar_select %p318, %s319, %s320
      %p324 = pneg %p318
      %p325 = scmp.eq.s32.totalorder %s31, 1
      %p326 = por %p324, %p325
      %p327 = scmp.ne.s32.totalorder %s319, %s322
      %p328 = scmp.eq.s32.totalorder %s31, 0
      %p329 = por %p327, %p328
      %p330 = scmp.ne.s32.totalorder %s319, %s322
      %p331 = scmp.eq.s32.totalorder %s36, 1
      %p332 = por %p330, %p331
      %p333 = scmp.ne.s32.totalorder %s322, %s323
      %p334 = scmp.eq.s32.totalorder %s36, 0
      %p335 = por %p333, %p334
      %p336 = scmp.ne.s32.totalorder %s322, %s323
      %p337 = scmp.eq.s32.totalorder %s37, 1
      %p338 = por %p336, %p337
      %p340 = scmp.ne.s32.totalorder %s323, %s339
      %p341 = scmp.eq.s32.totalorder %s37, 0
      %p342 = por %p340, %p341
      %p343 = scmp.le.s32.totalorder 1, %s31
      %p344 = scmp.lt.s32.totalorder %s31, 3
      %p345 = pnand %p343, %p344
      %p346 = pneg %p345
      // Predicated region
      $region9: #{transformer_encoder_layer.1} parent=5 // pred_check
        _
      $region10: #{transformer_encoder_layer.1} parent=5 // pred_check_branch
        %348 = sbr.rel (%p345) target = $region12
      $region11: #{transformer_encoder_layer.1} parent=5 // pred_region
        %s349 = ssub.s32 %s31, 1
        // Predicated region
        $region13: #{transformer_encoder_layer.1} parent=11 // pred_check
          %p350 = pneg %p78
        $region14: #{transformer_encoder_layer.1} parent=11 // pred_check_branch
          %352 = sbr.rel (%p350) target = $region16
        $region15: #{transformer_encoder_layer.1} parent=11 // pred_region
          %s354 = ssub.s32 16, 16
          %355 = vsyncadd [#allocation6], %s354
          %s357 = sshll.u32 [#allocation5], 4
          %s358 = int_to_ptr.vmem [resolvable:$true] %s357
          %360 = dma.hbm_to_vmem [thread:$0]  %s1, 16, %s358, [#allocation6]
        $region16: #{transformer_encoder_layer.1} parent=11 // pred_fallthru
          _
        // Predicated region
        $region17: #{transformer_encoder_layer.1} parent=11 // pred_check
          %p361 = pneg %p99
        $region18: #{transformer_encoder_layer.1} parent=11 // pred_check_branch
          %363 = sbr.rel (%p361) target = $region20
        $region19: #{transformer_encoder_layer.1} parent=11 // pred_region
          %s365 = ssub.s32 16, 16
          %366 = vsyncadd [#allocation6], %s365
          %s368 = sshll.u32 [#allocation7], 4
          %s369 = int_to_ptr.vmem [resolvable:$true] %s368
          %371 = dma.hbm_to_vmem [thread:$0]  %s2, 16, %s369, [#allocation6]
        $region20: #{transformer_encoder_layer.1} parent=11 // pred_fallthru
          _
        // Predicated region
        $region21: #{transformer_encoder_layer.1} parent=11 // pred_check
          %p372 = pneg %p120
        $region22: #{transformer_encoder_layer.1} parent=11 // pred_check_branch
          %374 = sbr.rel (%p372) target = $region24
        $region23: #{transformer_encoder_layer.1} parent=11 // pred_region
          %s376 = ssub.s32 16, 16
          %377 = vsyncadd [#allocation9], %s376
          %s379 = sshll.u32 [#allocation8], 4
          %s380 = int_to_ptr.vmem [resolvable:$true] %s379
          %382 = dma.hbm_to_vmem [thread:$0]  %s3, 16, %s380, [#allocation9]
        $region24: #{transformer_encoder_layer.1} parent=11 // pred_fallthru
          _
        // Predicated region
        $region25: #{transformer_encoder_layer.1} parent=11 // pred_check
          %p383 = pneg %p141
        $region26: #{transformer_encoder_layer.1} parent=11 // pred_check_branch
          %385 = sbr.rel (%p383) target = $region28
        $region27: #{transformer_encoder_layer.1} parent=11 // pred_region
          %s387 = ssub.s32 16, 16
          %388 = vsyncadd [#allocation9], %s387
          %s390 = sshll.u32 [#allocation10], 4
          %s391 = int_to_ptr.vmem [resolvable:$true] %s390
          %393 = dma.hbm_to_vmem [thread:$0]  %s4, 16, %s391, [#allocation9]
        $region28: #{transformer_encoder_layer.1} parent=11 // pred_fallthru
          _
        // Predicated region
        $region29: #{transformer_encoder_layer.1} parent=11 // pred_check
          %p394 = pneg %p162
        $region30: #{transformer_encoder_layer.1} parent=11 // pred_check_branch
          %396 = sbr.rel (%p394) target = $region32
        $region31: #{transformer_encoder_layer.1} parent=11 // pred_region
          %s398 = ssub.s32 256, 256
          %399 = vsyncadd [#allocation12], %s398
          %s400 = sshll.u32 [#allocation11], 4
          %s401 = int_to_ptr.vmem [resolvable:$true] %s400
          %406 = dma.hbm_to_vmem [thread:$0]  %s5, 256, %s401, [#allocation12], 64, 64, 4
        $region32: #{transformer_encoder_layer.1} parent=11 // pred_fallthru
          _
        // Predicated region
        $region33: #{transformer_encoder_layer.1} parent=11 // pred_check
          %p407 = pneg %p183
        $region34: #{transformer_encoder_layer.1} parent=11 // pred_check_branch
          %409 = sbr.rel (%p407) target = $region36
        $region35: #{transformer_encoder_layer.1} parent=11 // pred_region
          %s411 = ssub.s32 16, 16
          %412 = vsyncadd [#allocation12], %s411
          %s414 = sshll.u32 [#allocation13], 4
          %s415 = int_to_ptr.vmem [resolvable:$true] %s414
          %417 = dma.hbm_to_vmem [thread:$0]  %s6, 16, %s415, [#allocation12]
        $region36: #{transformer_encoder_layer.1} parent=11 // pred_fallthru
          _
        // Predicated region
        $region37: #{transformer_encoder_layer.1} parent=11 // pred_check
          %p418 = pneg %p204
        $region38: #{transformer_encoder_layer.1} parent=11 // pred_check_branch
          %420 = sbr.rel (%p418) target = $region40
        $region39: #{transformer_encoder_layer.1} parent=11 // pred_region
          %s422 = ssub.s32 256, 256
          %423 = vsyncadd [#allocation15], %s422
          %s424 = sshll.u32 [#allocation14], 4
          %s425 = int_to_ptr.vmem [resolvable:$true] %s424
          %430 = dma.hbm_to_vmem [thread:$0]  %s7, 256, %s425, [#allocation15], 64, 64, 4
        $region40: #{transformer_encoder_layer.1} parent=11 // pred_fallthru
          _
        // Predicated region
        $region41: #{transformer_encoder_layer.1} parent=11 // pred_check
          %p431 = pneg %p225
        $region42: #{transformer_encoder_layer.1} parent=11 // pred_check_branch
          %433 = sbr.rel (%p431) target = $region44
        $region43: #{transformer_encoder_layer.1} parent=11 // pred_region
          %s435 = ssub.s32 16, 16
          %436 = vsyncadd [#allocation15], %s435
          %s438 = sshll.u32 [#allocation16], 4
          %s439 = int_to_ptr.vmem [resolvable:$true] %s438
          %441 = dma.hbm_to_vmem [thread:$0]  %s8, 16, %s439, [#allocation15]
        $region44: #{transformer_encoder_layer.1} parent=11 // pred_fallthru
          _
        // Predicated region
        $region45: #{transformer_encoder_layer.1} parent=11 // pred_check
          %p442 = pneg %p246
        $region46: #{transformer_encoder_layer.1} parent=11 // pred_check_branch
          %444 = sbr.rel (%p442) target = $region48
        $region47: #{transformer_encoder_layer.1} parent=11 // pred_region
          %s446 = ssub.s32 256, 256
          %447 = vsyncadd [#allocation18], %s446
          %s448 = sshll.u32 [#allocation17], 4
          %s449 = int_to_ptr.vmem [resolvable:$true] %s448
          %454 = dma.hbm_to_vmem [thread:$0]  %s9, 256, %s449, [#allocation18], 64, 64, 4
        $region48: #{transformer_encoder_layer.1} parent=11 // pred_fallthru
          _
        // Predicated region
        $region49: #{transformer_encoder_layer.1} parent=11 // pred_check
          %p455 = pneg %p267
        $region50: #{transformer_encoder_layer.1} parent=11 // pred_check_branch
          %457 = sbr.rel (%p455) target = $region52
        $region51: #{transformer_encoder_layer.1} parent=11 // pred_region
          %s459 = ssub.s32 16, 16
          %460 = vsyncadd [#allocation18], %s459
          %s462 = sshll.u32 [#allocation19], 4
          %s463 = int_to_ptr.vmem [resolvable:$true] %s462
          %465 = dma.hbm_to_vmem [thread:$0]  %s10, 16, %s463, [#allocation18]
        $region52: #{transformer_encoder_layer.1} parent=11 // pred_fallthru
          _
        // Predicated region
        $region53: #{transformer_encoder_layer.1} parent=11 // pred_check
          %p466 = pneg %p288
        $region54: #{transformer_encoder_layer.1} parent=11 // pred_check_branch
          %468 = sbr.rel (%p466) target = $region56
        $region55: #{transformer_encoder_layer.1} parent=11 // pred_region
          %s470 = ssub.s32 1024, 1024
          %471 = vsyncadd [#allocation21], %s470
          %s472 = sshll.u32 [#allocation20], 4
          %s473 = int_to_ptr.vmem [resolvable:$true] %s472
          %478 = dma.hbm_to_vmem [thread:$0]  %s11, 1024, %s473, [#allocation21], 64, 64, 4
        $region56: #{transformer_encoder_layer.1} parent=11 // pred_fallthru
          _
        // Predicated region
        $region57: #{transformer_encoder_layer.1} parent=11 // pred_check
          %p479 = pneg %p309
        $region58: #{transformer_encoder_layer.1} parent=11 // pred_check_branch
          %481 = sbr.rel (%p479) target = $region60
        $region59: #{transformer_encoder_layer.1} parent=11 // pred_region
          %s483 = ssub.s32 16, 16
          %484 = vsyncadd [#allocation21], %s483
          %s486 = sshll.u32 [#allocation22], 4
          %s487 = int_to_ptr.vmem [resolvable:$true] %s486
          %489 = dma.hbm_to_vmem [thread:$0]  %s12, 16, %s487, [#allocation21]
        $region60: #{transformer_encoder_layer.1} parent=11 // pred_fallthru
          _
      $region12: #{transformer_encoder_layer.1} parent=5 // pred_fallthru
        _
      %p490 = scmp.lt.s32.totalorder %s31, 2
      // Predicated region
      $region61: #{transformer_encoder_layer.1} parent=5 // pred_check
        %p491 = pneg %p490
      $region62: #{transformer_encoder_layer.1} parent=5 // pred_check_branch
        %493 = sbr.rel (%p491) target = $region64
      $region63: #{transformer_encoder_layer.1} parent=5 // pred_region
        // Predicated region
        $region65: #{transformer_encoder_layer.1} parent=63 // pred_check
          %p494 = pneg %p51
        $region66: #{transformer_encoder_layer.1} parent=63 // pred_check_branch
          %496 = sbr.rel (%p494) target = $region68
        $region67: #{transformer_encoder_layer.1} parent=63 // pred_region
          %s497 = sand.u32 %s41, 1
          %s498 = scalar_lea.sflag [#allocation3], %s497
          %s499 = sand.u32 %s41, 1
          %s500 = smul.addr %s499, 8
          %s501 = scalar_lea.vmem [#allocation2], %s500
          %s503 = ssub.s32 128, 128
          %504 = vsyncadd %s498, %s503
          %s505 = smul.addr %s31, 128
          %s506 = scalar_lea.hbm %s0, %s505
          %s508 = sshll.u32 %s501, 4
          %s509 = int_to_ptr.vmem [resolvable:$true] %s508
          %511 = dma.hbm_to_vmem [thread:$0]  %s506, 128, %s509, %s498
        $region68: #{transformer_encoder_layer.1} parent=63 // pred_fallthru
          _
      $region64: #{transformer_encoder_layer.1} parent=5 // pred_fallthru
        _
      %p512 = scmp.le.s32.totalorder 1, %s31
      %p513 = scmp.lt.s32.totalorder %s31, 3
      %p514 = pnand %p512, %p513
      %p515 = pneg %p514
      // Predicated region
      $region69: #{transformer_encoder_layer.1} parent=5 // pred_check
        _
      $region70: #{transformer_encoder_layer.1} parent=5 // pred_check_branch
        %517 = sbr.rel (%p514) target = $region72
      $region71: #{transformer_encoder_layer.1} parent=5 // pred_region
        %s518 = ssub.s32 %s31, 1
        %s519 = sand.u32 %s44, 1
        %s520 = scalar_lea.sflag [#allocation3], %s519
        %s521 = sand.u32 %s44, 1
        %s522 = smul.addr %s521, 8
        %s523 = scalar_lea.vmem [#allocation2], %s522
        // Predicated region
        $region73: #{transformer_encoder_layer.1} parent=71 // pred_check
          %p524 = pneg %p57
        $region74: #{transformer_encoder_layer.1} parent=71 // pred_check_branch
          %526 = sbr.rel (%p524) target = $region76
        $region75: #{transformer_encoder_layer.1} parent=71 // pred_region
          %527 = dma.done %s520, 128
        $region76: #{transformer_encoder_layer.1} parent=71 // pred_fallthru
          _
        // Predicated region
        $region77: #{transformer_encoder_layer.1} parent=71 // pred_check
          %p528 = pneg %p78
        $region78: #{transformer_encoder_layer.1} parent=71 // pred_check_branch
          %530 = sbr.rel (%p528) target = $region80
        $region79: #{transformer_encoder_layer.1} parent=71 // pred_region
          %531 = dma.done [#allocation6], 16
        $region80: #{transformer_encoder_layer.1} parent=71 // pred_fallthru
          _
        // Predicated region
        $region81: #{transformer_encoder_layer.1} parent=71 // pred_check
          %p532 = pneg %p99
        $region82: #{transformer_encoder_layer.1} parent=71 // pred_check_branch
          %534 = sbr.rel (%p532) target = $region84
        $region83: #{transformer_encoder_layer.1} parent=71 // pred_region
          %535 = dma.done [#allocation6], 16
        $region84: #{transformer_encoder_layer.1} parent=71 // pred_fallthru
          _
        // Predicated region
        $region85: #{transformer_encoder_layer.1} parent=71 // pred_check
          %p536 = pneg %p120
        $region86: #{transformer_encoder_layer.1} parent=71 // pred_check_branch
          %538 = sbr.rel (%p536) target = $region88
        $region87: #{transformer_encoder_layer.1} parent=71 // pred_region
          %539 = dma.done [#allocation9], 16
        $region88: #{transformer_encoder_layer.1} parent=71 // pred_fallthru
          _
        // Predicated region
        $region89: #{transformer_encoder_layer.1} parent=71 // pred_check
          %p540 = pneg %p141
        $region90: #{transformer_encoder_layer.1} parent=71 // pred_check_branch
          %542 = sbr.rel (%p540) target = $region92
        $region91: #{transformer_encoder_layer.1} parent=71 // pred_region
          %543 = dma.done [#allocation9], 16
        $region92: #{transformer_encoder_layer.1} parent=71 // pred_fallthru
          _
        // Predicated region
        $region93: #{transformer_encoder_layer.1} parent=71 // pred_check
          %p544 = pneg %p162
        $region94: #{transformer_encoder_layer.1} parent=71 // pred_check_branch
          %546 = sbr.rel (%p544) target = $region96
        $region95: #{transformer_encoder_layer.1} parent=71 // pred_region
          %547 = dma.done [#allocation12], 256
        $region96: #{transformer_encoder_layer.1} parent=71 // pred_fallthru
          _
        // Predicated region
        $region97: #{transformer_encoder_layer.1} parent=71 // pred_check
          %p548 = pneg %p183
        $region98: #{transformer_encoder_layer.1} parent=71 // pred_check_branch
          %550 = sbr.rel (%p548) target = $region100
        $region99: #{transformer_encoder_layer.1} parent=71 // pred_region
          %551 = dma.done [#allocation12], 16
        $region100: #{transformer_encoder_layer.1} parent=71 // pred_fallthru
          _
        // Predicated region
        $region101: #{transformer_encoder_layer.1} parent=71 // pred_check
          %p552 = pneg %p204
        $region102: #{transformer_encoder_layer.1} parent=71 // pred_check_branch
          %554 = sbr.rel (%p552) target = $region104
        $region103: #{transformer_encoder_layer.1} parent=71 // pred_region
          %555 = dma.done [#allocation15], 256
        $region104: #{transformer_encoder_layer.1} parent=71 // pred_fallthru
          _
        // Predicated region
        $region105: #{transformer_encoder_layer.1} parent=71 // pred_check
          %p556 = pneg %p225
        $region106: #{transformer_encoder_layer.1} parent=71 // pred_check_branch
          %558 = sbr.rel (%p556) target = $region108
        $region107: #{transformer_encoder_layer.1} parent=71 // pred_region
          %559 = dma.done [#allocation15], 16
        $region108: #{transformer_encoder_layer.1} parent=71 // pred_fallthru
          _
        // Predicated region
        $region109: #{transformer_encoder_layer.1} parent=71 // pred_check
          %p560 = pneg %p246
        $region110: #{transformer_encoder_layer.1} parent=71 // pred_check_branch
          %562 = sbr.rel (%p560) target = $region112
        $region111: #{transformer_encoder_layer.1} parent=71 // pred_region
          %563 = dma.done [#allocation18], 256
        $region112: #{transformer_encoder_layer.1} parent=71 // pred_fallthru
          _
        // Predicated region
        $region113: #{transformer_encoder_layer.1} parent=71 // pred_check
          %p564 = pneg %p267
        $region114: #{transformer_encoder_layer.1} parent=71 // pred_check_branch
          %566 = sbr.rel (%p564) target = $region116
        $region115: #{transformer_encoder_layer.1} parent=71 // pred_region
          %567 = dma.done [#allocation18], 16
        $region116: #{transformer_encoder_layer.1} parent=71 // pred_fallthru
          _
        // Predicated region
        $region117: #{transformer_encoder_layer.1} parent=71 // pred_check
          %p568 = pneg %p288
        $region118: #{transformer_encoder_layer.1} parent=71 // pred_check_branch
          %570 = sbr.rel (%p568) target = $region120
        $region119: #{transformer_encoder_layer.1} parent=71 // pred_region
          %571 = dma.done [#allocation21], 1024
        $region120: #{transformer_encoder_layer.1} parent=71 // pred_fallthru
          _
        // Predicated region
        $region121: #{transformer_encoder_layer.1} parent=71 // pred_check
          %p572 = pneg %p309
        $region122: #{transformer_encoder_layer.1} parent=71 // pred_check_branch
          %574 = sbr.rel (%p572) target = $region124
        $region123: #{transformer_encoder_layer.1} parent=71 // pred_region
          %575 = dma.done [#allocation21], 16
        $region124: #{transformer_encoder_layer.1} parent=71 // pred_fallthru
          _
        %s576 = sand.u32 %s44, 1
        %s577 = scalar_lea.sflag [#allocation3], %s576
        %s578 = sand.u32 %s44, 1
        %s579 = smul.addr %s578, 8
        %s580 = scalar_lea.vmem [#allocation2], %s579
        %p581 = pneg %p57
        %p582 = pneg %p54
        %p583 = pneg %p78
        %p584 = pneg %p75
        %p585 = pneg %p99
        %p586 = pneg %p96
        %p587 = pneg %p120
        %p588 = pneg %p117
        %p589 = pneg %p141
        %p590 = pneg %p138
        %p591 = pneg %p162
        %p592 = pneg %p159
        %p593 = pneg %p183
        %p594 = pneg %p180
        %p595 = pneg %p204
        %p596 = pneg %p201
        %p597 = pneg %p225
        %p598 = pneg %p222
        %p599 = pneg %p246
        %p600 = pneg %p243
        %p601 = pneg %p267
        %p602 = pneg %p264
        %p603 = pneg %p288
        %p604 = pneg %p285
        %p605 = pneg %p309
        %p606 = pneg %p306
        %p607 = pneg %p335
        %p608 = pneg %p332
        %s609 = sand.u32 %s322, 1
        %s610 = scalar_lea.sflag [#allocation4], %s609
        %s611 = sand.u32 %s322, 1
        %s612 = smul.addr %s611, 8
        %s613 = scalar_lea.vmem [#allocation23], %s612
        %v615 = vld [vmem:[#allocation5] sm:$0x1]
        %v616 = vld [vmem:[#allocation7] sm:$0x1]
        %v617 = vld [vmem:[#allocation8] sm:$0x1]
        %v618 = vld [vmem:[#allocation10] sm:$0x1]
        %v619 = vld [vmem:[#allocation13] sm:$0x1]
        %v620 = vld [vmem:[#allocation16] sm:$0x1]
        %v621 = vld [vmem:[#allocation19] sm:$0x1]
        %v622 = vld [vmem:[#allocation22] sm:$0x1]
        %v623 = vld [vmem:[#allocation11] sm:$0xf]
        %v624 = vld [vmem:[#allocation11 + $0x4] sm:$0xf]
        %v625 = vld [vmem:[#allocation11 + $0x8] sm:$0xf]
        %v626 = vld [vmem:[#allocation11 + $0xc] sm:$0xf]
        %v627 = vld [vmem:[#allocation14] sm:$0xf]
        %v628 = vld [vmem:[#allocation14 + $0x4] sm:$0xf]
        %v629 = vld [vmem:[#allocation14 + $0x8] sm:$0xf]
        %v630 = vld [vmem:[#allocation14 + $0xc] sm:$0xf]
        %v631 = vld [vmem:[#allocation17] sm:$0xf]
        %v632 = vld [vmem:[#allocation17 + $0x4] sm:$0xf]
        %v633 = vld [vmem:[#allocation17 + $0x8] sm:$0xf]
        %v634 = vld [vmem:[#allocation17 + $0xc] sm:$0xf]
        %v635 = vld [vmem:[#allocation20] sm:$0xf]
        %v636 = vld [vmem:[#allocation20 + $0x4] sm:$0xf]
        %v637 = vld [vmem:[#allocation20 + $0x8] sm:$0xf]
        %v638 = vld [vmem:[#allocation20 + $0xc] sm:$0xf]
        %v639 = vld [vmem:[#allocation20 + $0x10] sm:$0xf]
        %v640 = vld [vmem:[#allocation20 + $0x14] sm:$0xf]
        %v641 = vld [vmem:[#allocation20 + $0x18] sm:$0xf]
        %v642 = vld [vmem:[#allocation20 + $0x1c] sm:$0xf]
        %v643 = vld [vmem:[#allocation20 + $0x20] sm:$0xf]
        %v644 = vld [vmem:[#allocation20 + $0x24] sm:$0xf]
        %v645 = vld [vmem:[#allocation20 + $0x28] sm:$0xf]
        %v646 = vld [vmem:[#allocation20 + $0x2c] sm:$0xf]
        %v647 = vld [vmem:[#allocation20 + $0x30] sm:$0xf]
        %v648 = vld [vmem:[#allocation20 + $0x34] sm:$0xf]
        %v649 = vld [vmem:[#allocation20 + $0x38] sm:$0xf]
        %v650 = vld [vmem:[#allocation20 + $0x3c] sm:$0xf]
        %v651 = vld [vmem:[%s523] sm:$0xff]
        %vm652 = vcmask 261120
        %v653 = vsel %vm652, %v651, 0.0
        %654 = vadd.xlane.f32.xlu0 %v653
        %v655 = vpop.xlane.xlu0 %654
        %v656 = vrcp.pop 32.0
        %v657 = vmul.f32 %v655, %v656
        %v658 = vsub.f32 %v651, %v657
        %v659 = vmul.f32 %v658, %v658
        %v660 = vsel %vm652, %v659, 0.0
        %661 = vadd.xlane.f32.xlu0 %v660
        %v662 = vpop.xlane.xlu0 %661
        %v663 = vmul.f32 %v662, %v656
        %v664 = vadd.f32 %v663, 1e-05
        %v665 = vrsqrt.pop %v664
        %v666 = vmul.f32 %v658, %v665
        %v668 = vlaneseq
        %v669 = vshrl.u32 %v668, 7
        %v670 = vsub.s32 0, %v669
        %v671 = vrot.slane %v615, %v670
        %v673 = vmul.f32 %v666, %v671
        %v675 = vlaneseq
        %v676 = vshrl.u32 %v675, 7
        %v677 = vsub.s32 0, %v676
        %v678 = vrot.slane %v616, %v677
        %v680 = vadd.f32 %v673, %v678
        %v681 = vpack.c.bf16 %v680, %v680
        %v683 = vlaneseq
        %v684 = vshrl.u32 %v683, 7
        %v685 = vsub.s32 0, %v684
        %v686 = vrot.slane %v619, %v685
        %v692 = vunpack.c.l.b16 %v623
        %v693 = vunpack.c.l.b16 %v624
        %v694 = vunpack.c.l.b16 %v625
        %v695 = vunpack.c.l.b16 %v626
        %v696 = vpack.c.b16 %v693, %v692
        %v697 = vpack.c.b16 %v695, %v694
        %v701 = vsel %vm652, %v681, 0
        %703 = vmatprep.subr.bf16.mxu0 0
        %704 = vmatpush1.bf16.msra.mxu0 %v696
        %705 = vmatprep.subr.bf16.mxu0 0
        %706 = vmatpush1.bf16.msra.mxu0 %v697
        %707 = vmatprep.subr.bf16.mxu0 0
        %708 = vmatpush1.bf16.msra.mxu0 0
        %709 = vmatprep.subr.bf16.mxu0 0
        %710 = vmatpush1.bf16.msra.mxu0 0
        %711 = vmatprep.subr.bf16.mxu0 0
        %712 = vmatpush1.bf16.msra.mxu0 0
        %713 = vmatprep.subr.bf16.mxu0 0
        %714 = vmatpush1.bf16.msra.mxu0 0
        %715 = vmatprep.subr.bf16.mxu0 0
        %716 = vmatpush1.bf16.msra.mxu0 0
        %717 = vmatprep.subr.bf16.mxu0 0
        %718 = vmatpush1.bf16.msra.mxu0 0
        %719 = vmatprep.subr.bf16.mxu0 0
        %720 = vmatpush1.bf16.msra.mxu0 0
        %721 = vmatprep.subr.bf16.mxu0 0
        %722 = vmatpush1.bf16.msra.mxu0 0
        %723 = vmatprep.subr.bf16.mxu0 0
        %724 = vmatpush1.bf16.msra.mxu0 0
        %725 = vmatprep.subr.bf16.mxu0 0
        %726 = vmatpush1.bf16.msra.mxu0 0
        %727 = vmatprep.subr.bf16.mxu0 0
        %728 = vmatpush1.bf16.msra.mxu0 0
        %729 = vmatprep.subr.bf16.mxu0 0
        %730 = vmatpush1.bf16.msra.mxu0 0
        %731 = vmatprep.subr.bf16.mxu0 0
        %732 = vmatpush1.bf16.msra.mxu0 0
        %733 = vmatprep.subr.bf16.mxu0 0
        %734 = vmatpush1.bf16.msra.mxu0 0
        %735 = vmatprep.mubr.bf16.mxu0 0
        %736 = vmatmul.mubr.bf16.gmra.mrb[0].mxu0 %v701
        %v737 = vpop.f32.mrb[0].mxu0
        %v738 = vadd.f32 %v686, %v737
        %v739 = vpop.f32.mrb[0].mxu0
        %v740 = vpop.f32.mrb[0].mxu0
        %v741 = vpop.f32.mrb[0].mxu0
        %742 = vdwg.mxu0
        %v743 = vmul.f32 %v738, 0.35355338
        %745 = vrot.lane.b32.xlu0 %v743, 120
        %v746 = vpop.permute.xlu0 %745
        %748 = vrot.lane.b32.xlu0 %v743, 112
        %v749 = vpop.permute.xlu0 %748
        %751 = vrot.lane.b32.xlu0 %v743, 104
        %v752 = vpop.permute.xlu0 %751
        %v754 = vcombine.low %v743, %v749
        %v755 = vcombine.high %v743, %v749
        %v757 = vunpack.c.l.s4 1983009808
        %v758 = vunpack.c.0.s8 %v757
        %v759 = vlaneseq
        %v760 = vshrl.u32 %v759, 7
        %v761 = vsub.s32 %v758, %v760
        %v762 = vrot.slane %v754, %v761
        %v764 = vunpack.c.l.s4 1983009808
        %v765 = vunpack.c.0.s8 %v764
        %v766 = vlaneseq
        %v767 = vshrl.u32 %v766, 7
        %v768 = vsub.s32 %v765, %v767
        %v769 = vrot.slane %v755, %v768
        %v770 = vcombine.low %v746, %v752
        %v771 = vcombine.high %v746, %v752
        %v773 = vunpack.c.l.s4 1983009808
        %v774 = vunpack.c.0.s8 %v773
        %v775 = vlaneseq
        %v776 = vshrl.u32 %v775, 7
        %v777 = vsub.s32 %v774, %v776
        %v778 = vrot.slane %v770, %v777
        %v780 = vunpack.c.l.s4 1983009808
        %v781 = vunpack.c.0.s8 %v780
        %v782 = vlaneseq
        %v783 = vshrl.u32 %v782, 7
        %v784 = vsub.s32 %v781, %v783
        %v785 = vrot.slane %v771, %v784
        %v786 = vcombine.low %v762, %v778
        %v787 = vcombine.high %v762, %v778
        %v789 = vunpack.c.l.s4 1934713408
        %v790 = vunpack.c.0.s8 %v789
        %v791 = vlaneseq
        %v792 = vshrl.u32 %v791, 7
        %v793 = vsub.s32 %v790, %v792
        %v794 = vrot.slane %v786, %v793
        %v796 = vunpack.c.l.s4 1934713408
        %v797 = vunpack.c.0.s8 %v796
        %v798 = vlaneseq
        %v799 = vshrl.u32 %v798, 7
        %v800 = vsub.s32 %v797, %v799
        %v801 = vrot.slane %v787, %v800
        %v802 = vcombine.low %v769, %v785
        %v803 = vcombine.high %v769, %v785
        %v805 = vunpack.c.l.s4 1934713408
        %v806 = vunpack.c.0.s8 %v805
        %v807 = vlaneseq
        %v808 = vshrl.u32 %v807, 7
        %v809 = vsub.s32 %v806, %v808
        %v810 = vrot.slane %v802, %v809
        %v812 = vunpack.c.l.s4 1934713408
        %v813 = vunpack.c.0.s8 %v812
        %v814 = vlaneseq
        %v815 = vshrl.u32 %v814, 7
        %v816 = vsub.s32 %v813, %v815
        %v817 = vrot.slane %v803, %v816
        %v818 = vcombine.high %v794, 0.0
        %v819 = vcombine.high %v801, 0.0
        %v820 = vcombine.high %v810, 0.0
        %v821 = vcombine.high %v817, 0.0
        %v822 = vcombine.low %v794, %v801
        %v824 = vunpack.c.l.s4 1983009808
        %v825 = vunpack.c.0.s8 %v824
        %v826 = vlaneseq
        %v827 = vshrl.u32 %v826, 7
        %v828 = vsub.s32 %v825, %v827
        %v829 = vrot.slane %v822, %v828
        %v830 = vcombine.low %v818, %v819
        %v832 = vunpack.c.l.s4 1983009808
        %v833 = vunpack.c.0.s8 %v832
        %v834 = vlaneseq
        %v835 = vshrl.u32 %v834, 7
        %v836 = vsub.s32 %v833, %v835
        %v837 = vrot.slane %v830, %v836
        %v838 = vcombine.low %v810, %v817
        %v840 = vunpack.c.l.s4 1983009808
        %v841 = vunpack.c.0.s8 %v840
        %v842 = vlaneseq
        %v843 = vshrl.u32 %v842, 7
        %v844 = vsub.s32 %v841, %v843
        %v845 = vrot.slane %v838, %v844
        %v846 = vcombine.low %v820, %v821
        %v848 = vunpack.c.l.s4 1983009808
        %v849 = vunpack.c.0.s8 %v848
        %v850 = vlaneseq
        %v851 = vshrl.u32 %v850, 7
        %v852 = vsub.s32 %v849, %v851
        %v853 = vrot.slane %v846, %v852
        %v854 = vcombine.low %v829, %v837
        %v855 = vcombine.high %v829, %v837
        %v857 = vunpack.c.l.s4 1934713408
        %v858 = vunpack.c.0.s8 %v857
        %v859 = vlaneseq
        %v860 = vshrl.u32 %v859, 7
        %v861 = vsub.s32 %v858, %v860
        %v862 = vrot.slane %v854, %v861
        %v864 = vunpack.c.l.s4 1934713408
        %v865 = vunpack.c.0.s8 %v864
        %v866 = vlaneseq
        %v867 = vshrl.u32 %v866, 7
        %v868 = vsub.s32 %v865, %v867
        %v869 = vrot.slane %v855, %v868
        %v870 = vcombine.low %v845, %v853
        %v871 = vcombine.high %v845, %v853
        %v873 = vunpack.c.l.s4 1934713408
        %v874 = vunpack.c.0.s8 %v873
        %v875 = vlaneseq
        %v876 = vshrl.u32 %v875, 7
        %v877 = vsub.s32 %v874, %v876
        %v878 = vrot.slane %v870, %v877
        %v880 = vunpack.c.l.s4 1934713408
        %v881 = vunpack.c.0.s8 %v880
        %v882 = vlaneseq
        %v883 = vshrl.u32 %v882, 7
        %v884 = vsub.s32 %v881, %v883
        %v885 = vrot.slane %v871, %v884
        %v886 = vcombine.low %v862, %v878
        %v887 = vcombine.high %v862, %v878
        %v888 = vcombine.low %v869, %v885
        %v889 = vcombine.high %v869, %v885
        %v890 = vpack.c.bf16 %v886, %v886
        %v891 = vpack.c.bf16 %v887, %v887
        %v892 = vpack.c.bf16 %v888, %v888
        %v893 = vpack.c.bf16 %v889, %v889
        %895 = vrot.lane.b32.xlu0 %v738, 120
        %v896 = vpop.permute.xlu0 %895
        %897 = vrot.lane.b32.xlu0 %v738, 112
        %v898 = vpop.permute.xlu0 %897
        %899 = vrot.lane.b32.xlu0 %v738, 104
        %v900 = vpop.permute.xlu0 %899
        %901 = vrot.lane.b32.xlu0 %v738, 96
        %v902 = vpop.permute.xlu0 %901
        %903 = vrot.lane.b32.xlu0 %v896, 96
        %v904 = vpop.permute.xlu0 %903
        %905 = vrot.lane.b32.xlu0 %v898, 96
        %v906 = vpop.permute.xlu0 %905
        %907 = vrot.lane.b32.xlu0 %v900, 96
        %v908 = vpop.permute.xlu0 %907
        %v913 = vcombine.low %v902, %v906
        %v914 = vcombine.high %v902, %v906
        %v916 = vunpack.c.l.s4 1983009808
        %v917 = vunpack.c.0.s8 %v916
        %v918 = vlaneseq
        %v919 = vshrl.u32 %v918, 7
        %v920 = vsub.s32 %v917, %v919
        %v921 = vrot.slane %v913, %v920
        %v923 = vunpack.c.l.s4 1983009808
        %v924 = vunpack.c.0.s8 %v923
        %v925 = vlaneseq
        %v926 = vshrl.u32 %v925, 7
        %v927 = vsub.s32 %v924, %v926
        %v928 = vrot.slane %v914, %v927
        %v929 = vcombine.low %v904, %v908
        %v930 = vcombine.high %v904, %v908
        %v932 = vunpack.c.l.s4 1983009808
        %v933 = vunpack.c.0.s8 %v932
        %v934 = vlaneseq
        %v935 = vshrl.u32 %v934, 7
        %v936 = vsub.s32 %v933, %v935
        %v937 = vrot.slane %v929, %v936
        %v939 = vunpack.c.l.s4 1983009808
        %v940 = vunpack.c.0.s8 %v939
        %v941 = vlaneseq
        %v942 = vshrl.u32 %v941, 7
        %v943 = vsub.s32 %v940, %v942
        %v944 = vrot.slane %v930, %v943
        %v945 = vcombine.low %v921, %v937
        %v946 = vcombine.high %v921, %v937
        %v948 = vunpack.c.l.s4 1934713408
        %v949 = vunpack.c.0.s8 %v948
        %v950 = vlaneseq
        %v951 = vshrl.u32 %v950, 7
        %v952 = vsub.s32 %v949, %v951
        %v953 = vrot.slane %v945, %v952
        %v955 = vunpack.c.l.s4 1934713408
        %v956 = vunpack.c.0.s8 %v955
        %v957 = vlaneseq
        %v958 = vshrl.u32 %v957, 7
        %v959 = vsub.s32 %v956, %v958
        %v960 = vrot.slane %v946, %v959
        %v961 = vcombine.low %v928, %v944
        %v962 = vcombine.high %v928, %v944
        %v964 = vunpack.c.l.s4 1934713408
        %v965 = vunpack.c.0.s8 %v964
        %v966 = vlaneseq
        %v967 = vshrl.u32 %v966, 7
        %v968 = vsub.s32 %v965, %v967
        %v969 = vrot.slane %v961, %v968
        %v971 = vunpack.c.l.s4 1934713408
        %v972 = vunpack.c.0.s8 %v971
        %v973 = vlaneseq
        %v974 = vshrl.u32 %v973, 7
        %v975 = vsub.s32 %v972, %v974
        %v976 = vrot.slane %v962, %v975
        %v977 = vcombine.high %v953, 0.0
        %v978 = vcombine.high %v960, 0.0
        %v979 = vcombine.high %v969, 0.0
        %v980 = vcombine.high %v976, 0.0
        %v981 = vcombine.low %v953, %v960
        %v983 = vunpack.c.l.s4 1983009808
        %v984 = vunpack.c.0.s8 %v983
        %v985 = vlaneseq
        %v986 = vshrl.u32 %v985, 7
        %v987 = vsub.s32 %v984, %v986
        %v988 = vrot.slane %v981, %v987
        %v989 = vcombine.low %v977, %v978
        %v991 = vunpack.c.l.s4 1983009808
        %v992 = vunpack.c.0.s8 %v991
        %v993 = vlaneseq
        %v994 = vshrl.u32 %v993, 7
        %v995 = vsub.s32 %v992, %v994
        %v996 = vrot.slane %v989, %v995
        %v997 = vcombine.low %v969, %v976
        %v999 = vunpack.c.l.s4 1983009808
        %v1000 = vunpack.c.0.s8 %v999
        %v1001 = vlaneseq
        %v1002 = vshrl.u32 %v1001, 7
        %v1003 = vsub.s32 %v1000, %v1002
        %v1004 = vrot.slane %v997, %v1003
        %v1005 = vcombine.low %v979, %v980
        %v1007 = vunpack.c.l.s4 1983009808
        %v1008 = vunpack.c.0.s8 %v1007
        %v1009 = vlaneseq
        %v1010 = vshrl.u32 %v1009, 7
        %v1011 = vsub.s32 %v1008, %v1010
        %v1012 = vrot.slane %v1005, %v1011
        %v1013 = vcombine.low %v988, %v996
        %v1014 = vcombine.high %v988, %v996
        %v1016 = vunpack.c.l.s4 1934713408
        %v1017 = vunpack.c.0.s8 %v1016
        %v1018 = vlaneseq
        %v1019 = vshrl.u32 %v1018, 7
        %v1020 = vsub.s32 %v1017, %v1019
        %v1021 = vrot.slane %v1013, %v1020
        %v1023 = vunpack.c.l.s4 1934713408
        %v1024 = vunpack.c.0.s8 %v1023
        %v1025 = vlaneseq
        %v1026 = vshrl.u32 %v1025, 7
        %v1027 = vsub.s32 %v1024, %v1026
        %v1028 = vrot.slane %v1014, %v1027
        %v1029 = vcombine.low %v1004, %v1012
        %v1030 = vcombine.high %v1004, %v1012
        %v1032 = vunpack.c.l.s4 1934713408
        %v1033 = vunpack.c.0.s8 %v1032
        %v1034 = vlaneseq
        %v1035 = vshrl.u32 %v1034, 7
        %v1036 = vsub.s32 %v1033, %v1035
        %v1037 = vrot.slane %v1029, %v1036
        %v1039 = vunpack.c.l.s4 1934713408
        %v1040 = vunpack.c.0.s8 %v1039
        %v1041 = vlaneseq
        %v1042 = vshrl.u32 %v1041, 7
        %v1043 = vsub.s32 %v1040, %v1042
        %v1044 = vrot.slane %v1030, %v1043
        %v1045 = vcombine.low %v1021, %v1037
        %v1046 = vcombine.high %v1021, %v1037
        %v1047 = vcombine.low %v1028, %v1044
        %v1048 = vcombine.high %v1028, %v1044
        %v1049 = vpack.c.bf16 %v1045, %v1045
        %v1050 = vpack.c.bf16 %v1046, %v1046
        %v1051 = vpack.c.bf16 %v1047, %v1047
        %v1052 = vpack.c.bf16 %v1048, %v1048
        %1053 = vrot.lane.b32.xlu0 %v738, 64
        %v1054 = vpop.permute.xlu0 %1053
        %1055 = vrot.lane.b32.xlu0 %v896, 64
        %v1056 = vpop.permute.xlu0 %1055
        %1057 = vrot.lane.b32.xlu0 %v898, 64
        %v1058 = vpop.permute.xlu0 %1057
        %1059 = vrot.lane.b32.xlu0 %v900, 64
        %v1060 = vpop.permute.xlu0 %1059
        %v1065 = vcombine.low %v1054, %v1058
        %v1066 = vcombine.high %v1054, %v1058
        %v1068 = vunpack.c.l.s4 1983009808
        %v1069 = vunpack.c.0.s8 %v1068
        %v1070 = vlaneseq
        %v1071 = vshrl.u32 %v1070, 7
        %v1072 = vsub.s32 %v1069, %v1071
        %v1073 = vrot.slane %v1065, %v1072
        %v1075 = vunpack.c.l.s4 1983009808
        %v1076 = vunpack.c.0.s8 %v1075
        %v1077 = vlaneseq
        %v1078 = vshrl.u32 %v1077, 7
        %v1079 = vsub.s32 %v1076, %v1078
        %v1080 = vrot.slane %v1066, %v1079
        %v1081 = vcombine.low %v1056, %v1060
        %v1082 = vcombine.high %v1056, %v1060
        %v1084 = vunpack.c.l.s4 1983009808
        %v1085 = vunpack.c.0.s8 %v1084
        %v1086 = vlaneseq
        %v1087 = vshrl.u32 %v1086, 7
        %v1088 = vsub.s32 %v1085, %v1087
        %v1089 = vrot.slane %v1081, %v1088
        %v1091 = vunpack.c.l.s4 1983009808
        %v1092 = vunpack.c.0.s8 %v1091
        %v1093 = vlaneseq
        %v1094 = vshrl.u32 %v1093, 7
        %v1095 = vsub.s32 %v1092, %v1094
        %v1096 = vrot.slane %v1082, %v1095
        %v1097 = vcombine.low %v1073, %v1089
        %v1098 = vcombine.high %v1073, %v1089
        %v1100 = vunpack.c.l.s4 1934713408
        %v1101 = vunpack.c.0.s8 %v1100
        %v1102 = vlaneseq
        %v1103 = vshrl.u32 %v1102, 7
        %v1104 = vsub.s32 %v1101, %v1103
        %v1105 = vrot.slane %v1097, %v1104
        %v1107 = vunpack.c.l.s4 1934713408
        %v1108 = vunpack.c.0.s8 %v1107
        %v1109 = vlaneseq
        %v1110 = vshrl.u32 %v1109, 7
        %v1111 = vsub.s32 %v1108, %v1110
        %v1112 = vrot.slane %v1098, %v1111
        %v1113 = vcombine.low %v1080, %v1096
        %v1114 = vcombine.high %v1080, %v1096
        %v1116 = vunpack.c.l.s4 1934713408
        %v1117 = vunpack.c.0.s8 %v1116
        %v1118 = vlaneseq
        %v1119 = vshrl.u32 %v1118, 7
        %v1120 = vsub.s32 %v1117, %v1119
        %v1121 = vrot.slane %v1113, %v1120
        %v1123 = vunpack.c.l.s4 1934713408
        %v1124 = vunpack.c.0.s8 %v1123
        %v1125 = vlaneseq
        %v1126 = vshrl.u32 %v1125, 7
        %v1127 = vsub.s32 %v1124, %v1126
        %v1128 = vrot.slane %v1114, %v1127
        %v1129 = vcombine.high %v1105, 0.0
        %v1130 = vcombine.high %v1112, 0.0
        %v1131 = vcombine.high %v1121, 0.0
        %v1132 = vcombine.high %v1128, 0.0
        %v1133 = vcombine.low %v1105, %v1112
        %v1135 = vunpack.c.l.s4 1983009808
        %v1136 = vunpack.c.0.s8 %v1135
        %v1137 = vlaneseq
        %v1138 = vshrl.u32 %v1137, 7
        %v1139 = vsub.s32 %v1136, %v1138
        %v1140 = vrot.slane %v1133, %v1139
        %v1141 = vcombine.low %v1129, %v1130
        %v1143 = vunpack.c.l.s4 1983009808
        %v1144 = vunpack.c.0.s8 %v1143
        %v1145 = vlaneseq
        %v1146 = vshrl.u32 %v1145, 7
        %v1147 = vsub.s32 %v1144, %v1146
        %v1148 = vrot.slane %v1141, %v1147
        %v1149 = vcombine.low %v1121, %v1128
        %v1151 = vunpack.c.l.s4 1983009808
        %v1152 = vunpack.c.0.s8 %v1151
        %v1153 = vlaneseq
        %v1154 = vshrl.u32 %v1153, 7
        %v1155 = vsub.s32 %v1152, %v1154
        %v1156 = vrot.slane %v1149, %v1155
        %v1157 = vcombine.low %v1131, %v1132
        %v1159 = vunpack.c.l.s4 1983009808
        %v1160 = vunpack.c.0.s8 %v1159
        %v1161 = vlaneseq
        %v1162 = vshrl.u32 %v1161, 7
        %v1163 = vsub.s32 %v1160, %v1162
        %v1164 = vrot.slane %v1157, %v1163
        %v1165 = vcombine.low %v1140, %v1148
        %v1166 = vcombine.high %v1140, %v1148
        %v1168 = vunpack.c.l.s4 1934713408
        %v1169 = vunpack.c.0.s8 %v1168
        %v1170 = vlaneseq
        %v1171 = vshrl.u32 %v1170, 7
        %v1172 = vsub.s32 %v1169, %v1171
        %v1173 = vrot.slane %v1165, %v1172
        %v1175 = vunpack.c.l.s4 1934713408
        %v1176 = vunpack.c.0.s8 %v1175
        %v1177 = vlaneseq
        %v1178 = vshrl.u32 %v1177, 7
        %v1179 = vsub.s32 %v1176, %v1178
        %v1180 = vrot.slane %v1166, %v1179
        %v1181 = vcombine.low %v1156, %v1164
        %v1182 = vcombine.high %v1156, %v1164
        %v1184 = vunpack.c.l.s4 1934713408
        %v1185 = vunpack.c.0.s8 %v1184
        %v1186 = vlaneseq
        %v1187 = vshrl.u32 %v1186, 7
        %v1188 = vsub.s32 %v1185, %v1187
        %v1189 = vrot.slane %v1181, %v1188
        %v1191 = vunpack.c.l.s4 1934713408
        %v1192 = vunpack.c.0.s8 %v1191
        %v1193 = vlaneseq
        %v1194 = vshrl.u32 %v1193, 7
        %v1195 = vsub.s32 %v1192, %v1194
        %v1196 = vrot.slane %v1182, %v1195
        %v1197 = vcombine.low %v1173, %v1189
        %v1198 = vcombine.high %v1173, %v1189
        %v1199 = vcombine.low %v1180, %v1196
        %v1200 = vcombine.high %v1180, %v1196
        %v1201 = vpack.c.bf16 %v1197, %v1197
        %v1202 = vpack.c.bf16 %v1198, %v1198
        %v1203 = vpack.c.bf16 %v1199, %v1199
        %v1204 = vpack.c.bf16 %v1200, %v1200
        %vm1205 = vcmask 64512
        %v1207 = vsel %vm1205, %v890, 0
        %v1210 = vsel %vm1205, %v1049, 0
        %1212 = vmatprep.subr.bf16.mxu0 0
        %1213 = vmatpush1.bf16.xpose.msra.mxu0 %v1210
        %1214 = vmatprep.subr.bf16.mxu0 0
        %1215 = vmatpush1.bf16.xpose.msra.mxu0 0
        %1216 = vmatprep.subr.bf16.mxu0 0
        %1217 = vmatpush1.bf16.xpose.msra.mxu0 0
        %1218 = vmatprep.subr.bf16.mxu0 0
        %1219 = vmatpush1.bf16.xpose.msra.mxu0 0
        %1220 = vmatprep.subr.bf16.mxu0 0
        %1221 = vmatpush1.bf16.xpose.msra.mxu0 0
        %1222 = vmatprep.subr.bf16.mxu0 0
        %1223 = vmatpush1.bf16.xpose.msra.mxu0 0
        %1224 = vmatprep.subr.bf16.mxu0 0
        %1225 = vmatpush1.bf16.xpose.msra.mxu0 0
        %1226 = vmatprep.subr.bf16.mxu0 0
        %1227 = vmatpush1.bf16.xpose.msra.mxu0 0
        %1228 = vmatprep.subr.bf16.mxu0 0
        %1229 = vmatpush1.bf16.xpose.msra.mxu0 0
        %1230 = vmatprep.subr.bf16.mxu0 0
        %1231 = vmatpush1.bf16.xpose.msra.mxu0 0
        %1232 = vmatprep.subr.bf16.mxu0 0
        %1233 = vmatpush1.bf16.xpose.msra.mxu0 0
        %1234 = vmatprep.subr.bf16.mxu0 0
        %1235 = vmatpush1.bf16.xpose.msra.mxu0 0
        %1236 = vmatprep.subr.bf16.mxu0 0
        %1237 = vmatpush1.bf16.xpose.msra.mxu0 0
        %1238 = vmatprep.subr.bf16.mxu0 0
        %1239 = vmatpush1.bf16.xpose.msra.mxu0 0
        %1240 = vmatprep.subr.bf16.mxu0 0
        %1241 = vmatpush1.bf16.xpose.msra.mxu0 0
        %1242 = vmatprep.subr.bf16.mxu0 0
        %1243 = vmatpush1.bf16.xpose.msra.mxu0 0
        %1244 = vmatprep.mubr.bf16.mxu0 0
        %1245 = vmatmul.mubr.bf16.gmra.mrb[0].mxu0 %v1207
        %v1246 = vpop.f32.mrb[0].mxu0
        %v1247 = vadd.f32 0.0, %v1246
        %v1248 = vpop.f32.mrb[0].mxu0
        %v1249 = vpop.f32.mrb[0].mxu0
        %v1250 = vpop.f32.mrb[0].mxu0
        %1251 = vdwg.mxu0
        %v1253 = vsel %vm1205, %v891, 0
        %v1256 = vsel %vm1205, %v1050, 0
        %1258 = vmatprep.subr.bf16.mxu0 0
        %1259 = vmatpush1.bf16.xpose.msra.mxu0 %v1256
        %1260 = vmatprep.subr.bf16.mxu0 0
        %1261 = vmatpush1.bf16.xpose.msra.mxu0 0
        %1262 = vmatprep.subr.bf16.mxu0 0
        %1263 = vmatpush1.bf16.xpose.msra.mxu0 0
        %1264 = vmatprep.subr.bf16.mxu0 0
        %1265 = vmatpush1.bf16.xpose.msra.mxu0 0
        %1266 = vmatprep.subr.bf16.mxu0 0
        %1267 = vmatpush1.bf16.xpose.msra.mxu0 0
        %1268 = vmatprep.subr.bf16.mxu0 0
        %1269 = vmatpush1.bf16.xpose.msra.mxu0 0
        %1270 = vmatprep.subr.bf16.mxu0 0
        %1271 = vmatpush1.bf16.xpose.msra.mxu0 0
        %1272 = vmatprep.subr.bf16.mxu0 0
        %1273 = vmatpush1.bf16.xpose.msra.mxu0 0
        %1274 = vmatprep.subr.bf16.mxu0 0
        %1275 = vmatpush1.bf16.xpose.msra.mxu0 0
        %1276 = vmatprep.subr.bf16.mxu0 0
        %1277 = vmatpush1.bf16.xpose.msra.mxu0 0
        %1278 = vmatprep.subr.bf16.mxu0 0
        %1279 = vmatpush1.bf16.xpose.msra.mxu0 0
        %1280 = vmatprep.subr.bf16.mxu0 0
        %1281 = vmatpush1.bf16.xpose.msra.mxu0 0
        %1282 = vmatprep.subr.bf16.mxu0 0
        %1283 = vmatpush1.bf16.xpose.msra.mxu0 0
        %1284 = vmatprep.subr.bf16.mxu0 0
        %1285 = vmatpush1.bf16.xpose.msra.mxu0 0
        %1286 = vmatprep.subr.bf16.mxu0 0
        %1287 = vmatpush1.bf16.xpose.msra.mxu0 0
        %1288 = vmatprep.subr.bf16.mxu0 0
        %1289 = vmatpush1.bf16.xpose.msra.mxu0 0
        %1290 = vmatprep.mubr.bf16.mxu0 0
        %1291 = vmatmul.mubr.bf16.gmra.mrb[0].mxu0 %v1253
        %v1292 = vpop.f32.mrb[0].mxu0
        %v1293 = vadd.f32 0.0, %v1292
        %v1294 = vpop.f32.mrb[0].mxu0
        %v1295 = vpop.f32.mrb[0].mxu0
        %v1296 = vpop.f32.mrb[0].mxu0
        %1297 = vdwg.mxu0
        %v1299 = vsel %vm1205, %v892, 0
        %v1302 = vsel %vm1205, %v1051, 0
        %1304 = vmatprep.subr.bf16.mxu0 0
        %1305 = vmatpush1.bf16.xpose.msra.mxu0 %v1302
        %1306 = vmatprep.subr.bf16.mxu0 0
        %1307 = vmatpush1.bf16.xpose.msra.mxu0 0
        %1308 = vmatprep.subr.bf16.mxu0 0
        %1309 = vmatpush1.bf16.xpose.msra.mxu0 0
        %1310 = vmatprep.subr.bf16.mxu0 0
        %1311 = vmatpush1.bf16.xpose.msra.mxu0 0
        %1312 = vmatprep.subr.bf16.mxu0 0
        %1313 = vmatpush1.bf16.xpose.msra.mxu0 0
        %1314 = vmatprep.subr.bf16.mxu0 0
        %1315 = vmatpush1.bf16.xpose.msra.mxu0 0
        %1316 = vmatprep.subr.bf16.mxu0 0
        %1317 = vmatpush1.bf16.xpose.msra.mxu0 0
        %1318 = vmatprep.subr.bf16.mxu0 0
        %1319 = vmatpush1.bf16.xpose.msra.mxu0 0
        %1320 = vmatprep.subr.bf16.mxu0 0
        %1321 = vmatpush1.bf16.xpose.msra.mxu0 0
        %1322 = vmatprep.subr.bf16.mxu0 0
        %1323 = vmatpush1.bf16.xpose.msra.mxu0 0
        %1324 = vmatprep.subr.bf16.mxu0 0
        %1325 = vmatpush1.bf16.xpose.msra.mxu0 0
        %1326 = vmatprep.subr.bf16.mxu0 0
        %1327 = vmatpush1.bf16.xpose.msra.mxu0 0
        %1328 = vmatprep.subr.bf16.mxu0 0
        %1329 = vmatpush1.bf16.xpose.msra.mxu0 0
        %1330 = vmatprep.subr.bf16.mxu0 0
        %1331 = vmatpush1.bf16.xpose.msra.mxu0 0
        %1332 = vmatprep.subr.bf16.mxu0 0
        %1333 = vmatpush1.bf16.xpose.msra.mxu0 0
        %1334 = vmatprep.subr.bf16.mxu0 0
        %1335 = vmatpush1.bf16.xpose.msra.mxu0 0
        %1336 = vmatprep.mubr.bf16.mxu0 0
        %1337 = vmatmul.mubr.bf16.gmra.mrb[0].mxu0 %v1299
        %v1338 = vpop.f32.mrb[0].mxu0
        %v1339 = vadd.f32 0.0, %v1338
        %v1340 = vpop.f32.mrb[0].mxu0
        %v1341 = vpop.f32.mrb[0].mxu0
        %v1342 = vpop.f32.mrb[0].mxu0
        %1343 = vdwg.mxu0
        %v1345 = vsel %vm1205, %v893, 0
        %v1348 = vsel %vm1205, %v1052, 0
        %1350 = vmatprep.subr.bf16.mxu0 0
        %1351 = vmatpush1.bf16.xpose.msra.mxu0 %v1348
        %1352 = vmatprep.subr.bf16.mxu0 0
        %1353 = vmatpush1.bf16.xpose.msra.mxu0 0
        %1354 = vmatprep.subr.bf16.mxu0 0
        %1355 = vmatpush1.bf16.xpose.msra.mxu0 0
        %1356 = vmatprep.subr.bf16.mxu0 0
        %1357 = vmatpush1.bf16.xpose.msra.mxu0 0
        %1358 = vmatprep.subr.bf16.mxu0 0
        %1359 = vmatpush1.bf16.xpose.msra.mxu0 0
        %1360 = vmatprep.subr.bf16.mxu0 0
        %1361 = vmatpush1.bf16.xpose.msra.mxu0 0
        %1362 = vmatprep.subr.bf16.mxu0 0
        %1363 = vmatpush1.bf16.xpose.msra.mxu0 0
        %1364 = vmatprep.subr.bf16.mxu0 0
        %1365 = vmatpush1.bf16.xpose.msra.mxu0 0
        %1366 = vmatprep.subr.bf16.mxu0 0
        %1367 = vmatpush1.bf16.xpose.msra.mxu0 0
        %1368 = vmatprep.subr.bf16.mxu0 0
        %1369 = vmatpush1.bf16.xpose.msra.mxu0 0
        %1370 = vmatprep.subr.bf16.mxu0 0
        %1371 = vmatpush1.bf16.xpose.msra.mxu0 0
        %1372 = vmatprep.subr.bf16.mxu0 0
        %1373 = vmatpush1.bf16.xpose.msra.mxu0 0
        %1374 = vmatprep.subr.bf16.mxu0 0
        %1375 = vmatpush1.bf16.xpose.msra.mxu0 0
        %1376 = vmatprep.subr.bf16.mxu0 0
        %1377 = vmatpush1.bf16.xpose.msra.mxu0 0
        %1378 = vmatprep.subr.bf16.mxu0 0
        %1379 = vmatpush1.bf16.xpose.msra.mxu0 0
        %1380 = vmatprep.subr.bf16.mxu0 0
        %1381 = vmatpush1.bf16.xpose.msra.mxu0 0
        %1382 = vmatprep.mubr.bf16.mxu0 0
        %1383 = vmatmul.mubr.bf16.gmra.mrb[0].mxu0 %v1345
        %v1384 = vpop.f32.mrb[0].mxu0
        %v1385 = vadd.f32 0.0, %v1384
        %v1386 = vpop.f32.mrb[0].mxu0
        %v1387 = vpop.f32.mrb[0].mxu0
        %v1388 = vpop.f32.mrb[0].mxu0
        %1389 = vdwg.mxu0
        %v1390 = vsel %vm1205, %v1247, -inf
        %1391 = vmax.xlane.f32.xlu0 %v1390
        %v1392 = vpop.xlane.xlu0 %1391
        %v1393 = vsel %vm1205, %v1293, -inf
        %1394 = vmax.xlane.f32.xlu0 %v1393
        %v1395 = vpop.xlane.xlu0 %1394
        %v1396 = vsel %vm1205, %v1339, -inf
        %1397 = vmax.xlane.f32.xlu0 %v1396
        %v1398 = vpop.xlane.xlu0 %1397
        %v1399 = vsel %vm1205, %v1385, -inf
        %1400 = vmax.xlane.f32.xlu0 %v1399
        %v1401 = vpop.xlane.xlu0 %1400
        %v1402 = vsub.f32 %v1247, %v1392
        %v1403 = vsub.f32 %v1293, %v1395
        %v1404 = vsub.f32 %v1339, %v1398
        %v1405 = vsub.f32 %v1385, %v1401
        %v1406 = vmul.f32 %v1402, 1.442695
        %v1407 = vpow.pop %v1406
        %v1408 = vmul.f32 %v1403, 1.442695
        %v1409 = vpow.pop %v1408
        %v1410 = vmul.f32 %v1404, 1.442695
        %v1411 = vpow.pop %v1410
        %v1412 = vmul.f32 %v1405, 1.442695
        %v1413 = vpow.pop %v1412
        %v1414 = vsel %vm1205, %v1407, 0.0
        %1415 = vadd.xlane.f32.xlu0 %v1414
        %v1416 = vpop.xlane.xlu0 %1415
        %v1417 = vsel %vm1205, %v1409, 0.0
        %1418 = vadd.xlane.f32.xlu0 %v1417
        %v1419 = vpop.xlane.xlu0 %1418
        %v1420 = vsel %vm1205, %v1411, 0.0
        %1421 = vadd.xlane.f32.xlu0 %v1420
        %v1422 = vpop.xlane.xlu0 %1421
        %v1423 = vsel %vm1205, %v1413, 0.0
        %1424 = vadd.xlane.f32.xlu0 %v1423
        %v1425 = vpop.xlane.xlu0 %1424
        %v1426 = vpack.c.bf16 %v1407, %v1407
        %v1427 = vpack.c.bf16 %v1409, %v1409
        %v1428 = vpack.c.bf16 %v1411, %v1411
        %v1429 = vpack.c.bf16 %v1413, %v1413
        %v1431 = vsel %vm1205, %v1426, 0
        %vm1433 = vcmask 1043456
        %v1435 = vsel %vm1433, %v1201, 0
        %1437 = vmatprep.subr.bf16.mxu0 0
        %1438 = vmatpush1.bf16.msra.mxu0 %v1435
        %1439 = vmatprep.subr.bf16.mxu0 0
        %1440 = vmatpush1.bf16.msra.mxu0 0
        %1441 = vmatprep.subr.bf16.mxu0 0
        %1442 = vmatpush1.bf16.msra.mxu0 0
        %1443 = vmatprep.subr.bf16.mxu0 0
        %1444 = vmatpush1.bf16.msra.mxu0 0
        %1445 = vmatprep.subr.bf16.mxu0 0
        %1446 = vmatpush1.bf16.msra.mxu0 0
        %1447 = vmatprep.subr.bf16.mxu0 0
        %1448 = vmatpush1.bf16.msra.mxu0 0
        %1449 = vmatprep.subr.bf16.mxu0 0
        %1450 = vmatpush1.bf16.msra.mxu0 0
        %1451 = vmatprep.subr.bf16.mxu0 0
        %1452 = vmatpush1.bf16.msra.mxu0 0
        %1453 = vmatprep.subr.bf16.mxu0 0
        %1454 = vmatpush1.bf16.msra.mxu0 0
        %1455 = vmatprep.subr.bf16.mxu0 0
        %1456 = vmatpush1.bf16.msra.mxu0 0
        %1457 = vmatprep.subr.bf16.mxu0 0
        %1458 = vmatpush1.bf16.msra.mxu0 0
        %1459 = vmatprep.subr.bf16.mxu0 0
        %1460 = vmatpush1.bf16.msra.mxu0 0
        %1461 = vmatprep.subr.bf16.mxu0 0
        %1462 = vmatpush1.bf16.msra.mxu0 0
        %1463 = vmatprep.subr.bf16.mxu0 0
        %1464 = vmatpush1.bf16.msra.mxu0 0
        %1465 = vmatprep.subr.bf16.mxu0 0
        %1466 = vmatpush1.bf16.msra.mxu0 0
        %1467 = vmatprep.subr.bf16.mxu0 0
        %1468 = vmatpush1.bf16.msra.mxu0 0
        %1469 = vmatprep.mubr.bf16.mxu0 0
        %1470 = vmatmul.mubr.bf16.gmra.mrb[0].mxu0 %v1431
        %v1471 = vpop.f32.mrb[0].mxu0
        %v1472 = vadd.f32 0.0, %v1471
        %v1473 = vpop.f32.mrb[0].mxu0
        %v1474 = vpop.f32.mrb[0].mxu0
        %v1475 = vpop.f32.mrb[0].mxu0
        %1476 = vdwg.mxu0
        %v1478 = vsel %vm1205, %v1427, 0
        %v1481 = vsel %vm1433, %v1202, 0
        %1483 = vmatprep.subr.bf16.mxu0 0
        %1484 = vmatpush1.bf16.msra.mxu0 %v1481
        %1485 = vmatprep.subr.bf16.mxu0 0
        %1486 = vmatpush1.bf16.msra.mxu0 0
        %1487 = vmatprep.subr.bf16.mxu0 0
        %1488 = vmatpush1.bf16.msra.mxu0 0
        %1489 = vmatprep.subr.bf16.mxu0 0
        %1490 = vmatpush1.bf16.msra.mxu0 0
        %1491 = vmatprep.subr.bf16.mxu0 0
        %1492 = vmatpush1.bf16.msra.mxu0 0
        %1493 = vmatprep.subr.bf16.mxu0 0
        %1494 = vmatpush1.bf16.msra.mxu0 0
        %1495 = vmatprep.subr.bf16.mxu0 0
        %1496 = vmatpush1.bf16.msra.mxu0 0
        %1497 = vmatprep.subr.bf16.mxu0 0
        %1498 = vmatpush1.bf16.msra.mxu0 0
        %1499 = vmatprep.subr.bf16.mxu0 0
        %1500 = vmatpush1.bf16.msra.mxu0 0
        %1501 = vmatprep.subr.bf16.mxu0 0
        %1502 = vmatpush1.bf16.msra.mxu0 0
        %1503 = vmatprep.subr.bf16.mxu0 0
        %1504 = vmatpush1.bf16.msra.mxu0 0
        %1505 = vmatprep.subr.bf16.mxu0 0
        %1506 = vmatpush1.bf16.msra.mxu0 0
        %1507 = vmatprep.subr.bf16.mxu0 0
        %1508 = vmatpush1.bf16.msra.mxu0 0
        %1509 = vmatprep.subr.bf16.mxu0 0
        %1510 = vmatpush1.bf16.msra.mxu0 0
        %1511 = vmatprep.subr.bf16.mxu0 0
        %1512 = vmatpush1.bf16.msra.mxu0 0
        %1513 = vmatprep.subr.bf16.mxu0 0
        %1514 = vmatpush1.bf16.msra.mxu0 0
        %1515 = vmatprep.mubr.bf16.mxu0 0
        %1516 = vmatmul.mubr.bf16.gmra.mrb[0].mxu0 %v1478
        %v1517 = vpop.f32.mrb[0].mxu0
        %v1518 = vadd.f32 0.0, %v1517
        %v1519 = vpop.f32.mrb[0].mxu0
        %v1520 = vpop.f32.mrb[0].mxu0
        %v1521 = vpop.f32.mrb[0].mxu0
        %1522 = vdwg.mxu0
        %v1524 = vsel %vm1205, %v1428, 0
        %v1527 = vsel %vm1433, %v1203, 0
        %1529 = vmatprep.subr.bf16.mxu0 0
        %1530 = vmatpush1.bf16.msra.mxu0 %v1527
        %1531 = vmatprep.subr.bf16.mxu0 0
        %1532 = vmatpush1.bf16.msra.mxu0 0
        %1533 = vmatprep.subr.bf16.mxu0 0
        %1534 = vmatpush1.bf16.msra.mxu0 0
        %1535 = vmatprep.subr.bf16.mxu0 0
        %1536 = vmatpush1.bf16.msra.mxu0 0
        %1537 = vmatprep.subr.bf16.mxu0 0
        %1538 = vmatpush1.bf16.msra.mxu0 0
        %1539 = vmatprep.subr.bf16.mxu0 0
        %1540 = vmatpush1.bf16.msra.mxu0 0
        %1541 = vmatprep.subr.bf16.mxu0 0
        %1542 = vmatpush1.bf16.msra.mxu0 0
        %1543 = vmatprep.subr.bf16.mxu0 0
        %1544 = vmatpush1.bf16.msra.mxu0 0
        %1545 = vmatprep.subr.bf16.mxu0 0
        %1546 = vmatpush1.bf16.msra.mxu0 0
        %1547 = vmatprep.subr.bf16.mxu0 0
        %1548 = vmatpush1.bf16.msra.mxu0 0
        %1549 = vmatprep.subr.bf16.mxu0 0
        %1550 = vmatpush1.bf16.msra.mxu0 0
        %1551 = vmatprep.subr.bf16.mxu0 0
        %1552 = vmatpush1.bf16.msra.mxu0 0
        %1553 = vmatprep.subr.bf16.mxu0 0
        %1554 = vmatpush1.bf16.msra.mxu0 0
        %1555 = vmatprep.subr.bf16.mxu0 0
        %1556 = vmatpush1.bf16.msra.mxu0 0
        %1557 = vmatprep.subr.bf16.mxu0 0
        %1558 = vmatpush1.bf16.msra.mxu0 0
        %1559 = vmatprep.subr.bf16.mxu0 0
        %1560 = vmatpush1.bf16.msra.mxu0 0
        %1561 = vmatprep.mubr.bf16.mxu0 0
        %1562 = vmatmul.mubr.bf16.gmra.mrb[0].mxu0 %v1524
        %v1563 = vpop.f32.mrb[0].mxu0
        %v1564 = vadd.f32 0.0, %v1563
        %v1565 = vpop.f32.mrb[0].mxu0
        %v1566 = vpop.f32.mrb[0].mxu0
        %v1567 = vpop.f32.mrb[0].mxu0
        %1568 = vdwg.mxu0
        %v1570 = vsel %vm1205, %v1429, 0
        %v1573 = vsel %vm1433, %v1204, 0
        %1575 = vmatprep.subr.bf16.mxu0 0
        %1576 = vmatpush1.bf16.msra.mxu0 %v1573
        %1577 = vmatprep.subr.bf16.mxu0 0
        %1578 = vmatpush1.bf16.msra.mxu0 0
        %1579 = vmatprep.subr.bf16.mxu0 0
        %1580 = vmatpush1.bf16.msra.mxu0 0
        %1581 = vmatprep.subr.bf16.mxu0 0
        %1582 = vmatpush1.bf16.msra.mxu0 0
        %1583 = vmatprep.subr.bf16.mxu0 0
        %1584 = vmatpush1.bf16.msra.mxu0 0
        %1585 = vmatprep.subr.bf16.mxu0 0
        %1586 = vmatpush1.bf16.msra.mxu0 0
        %1587 = vmatprep.subr.bf16.mxu0 0
        %1588 = vmatpush1.bf16.msra.mxu0 0
        %1589 = vmatprep.subr.bf16.mxu0 0
        %1590 = vmatpush1.bf16.msra.mxu0 0
        %1591 = vmatprep.subr.bf16.mxu0 0
        %1592 = vmatpush1.bf16.msra.mxu0 0
        %1593 = vmatprep.subr.bf16.mxu0 0
        %1594 = vmatpush1.bf16.msra.mxu0 0
        %1595 = vmatprep.subr.bf16.mxu0 0
        %1596 = vmatpush1.bf16.msra.mxu0 0
        %1597 = vmatprep.subr.bf16.mxu0 0
        %1598 = vmatpush1.bf16.msra.mxu0 0
        %1599 = vmatprep.subr.bf16.mxu0 0
        %1600 = vmatpush1.bf16.msra.mxu0 0
        %1601 = vmatprep.subr.bf16.mxu0 0
        %1602 = vmatpush1.bf16.msra.mxu0 0
        %1603 = vmatprep.subr.bf16.mxu0 0
        %1604 = vmatpush1.bf16.msra.mxu0 0
        %1605 = vmatprep.subr.bf16.mxu0 0
        %1606 = vmatpush1.bf16.msra.mxu0 0
        %1607 = vmatprep.mubr.bf16.mxu0 0
        %1608 = vmatmul.mubr.bf16.gmra.mrb[0].mxu0 %v1570
        %v1609 = vpop.f32.mrb[0].mxu0
        %v1610 = vadd.f32 0.0, %v1609
        %v1611 = vpop.f32.mrb[0].mxu0
        %v1612 = vpop.f32.mrb[0].mxu0
        %v1613 = vpop.f32.mrb[0].mxu0
        %1614 = vdwg.mxu0
        %v1615 = vrcp.pop %v1416
        %v1616 = vmul.f32 %v1472, %v1615
        %v1617 = vrcp.pop %v1419
        %v1618 = vmul.f32 %v1518, %v1617
        %v1619 = vrcp.pop %v1422
        %v1620 = vmul.f32 %v1564, %v1619
        %v1621 = vrcp.pop %v1425
        %v1622 = vmul.f32 %v1610, %v1621
        %v1623 = vcombine.low %v1616, %v1620
        %v1624 = vcombine.high %v1616, %v1620
        %v1626 = vunpack.c.l.s4 1983009808
        %v1627 = vunpack.c.0.s8 %v1626
        %v1628 = vlaneseq
        %v1629 = vshrl.u32 %v1628, 7
        %v1630 = vsub.s32 %v1627, %v1629
        %v1631 = vrot.slane %v1623, %v1630
        %v1633 = vunpack.c.l.s4 1983009808
        %v1634 = vunpack.c.0.s8 %v1633
        %v1635 = vlaneseq
        %v1636 = vshrl.u32 %v1635, 7
        %v1637 = vsub.s32 %v1634, %v1636
        %v1638 = vrot.slane %v1624, %v1637
        %v1639 = vcombine.low %v1618, %v1622
        %v1640 = vcombine.high %v1618, %v1622
        %v1642 = vunpack.c.l.s4 1983009808
        %v1643 = vunpack.c.0.s8 %v1642
        %v1644 = vlaneseq
        %v1645 = vshrl.u32 %v1644, 7
        %v1646 = vsub.s32 %v1643, %v1645
        %v1647 = vrot.slane %v1639, %v1646
        %v1649 = vunpack.c.l.s4 1983009808
        %v1650 = vunpack.c.0.s8 %v1649
        %v1651 = vlaneseq
        %v1652 = vshrl.u32 %v1651, 7
        %v1653 = vsub.s32 %v1650, %v1652
        %v1654 = vrot.slane %v1640, %v1653
        %v1655 = vcombine.low %v1631, %v1647
        %v1656 = vcombine.high %v1631, %v1647
        %v1658 = vunpack.c.l.s4 1934713408
        %v1659 = vunpack.c.0.s8 %v1658
        %v1660 = vlaneseq
        %v1661 = vshrl.u32 %v1660, 7
        %v1662 = vsub.s32 %v1659, %v1661
        %v1663 = vrot.slane %v1655, %v1662
        %v1665 = vunpack.c.l.s4 1934713408
        %v1666 = vunpack.c.0.s8 %v1665
        %v1667 = vlaneseq
        %v1668 = vshrl.u32 %v1667, 7
        %v1669 = vsub.s32 %v1666, %v1668
        %v1670 = vrot.slane %v1656, %v1669
        %v1671 = vcombine.low %v1638, %v1654
        %v1672 = vcombine.high %v1638, %v1654
        %v1674 = vunpack.c.l.s4 1934713408
        %v1675 = vunpack.c.0.s8 %v1674
        %v1676 = vlaneseq
        %v1677 = vshrl.u32 %v1676, 7
        %v1678 = vsub.s32 %v1675, %v1677
        %v1679 = vrot.slane %v1671, %v1678
        %v1681 = vunpack.c.l.s4 1934713408
        %v1682 = vunpack.c.0.s8 %v1681
        %v1683 = vlaneseq
        %v1684 = vshrl.u32 %v1683, 7
        %v1685 = vsub.s32 %v1682, %v1684
        %v1686 = vrot.slane %v1672, %v1685
        %v1687 = vcombine.high %v1663, 0.0
        %v1688 = vcombine.high %v1670, 0.0
        %v1689 = vcombine.high %v1679, 0.0
        %v1690 = vcombine.high %v1686, 0.0
        %v1691 = vcombine.low %v1663, %v1670
        %v1693 = vunpack.c.l.s4 1983009808
        %v1694 = vunpack.c.0.s8 %v1693
        %v1695 = vlaneseq
        %v1696 = vshrl.u32 %v1695, 7
        %v1697 = vsub.s32 %v1694, %v1696
        %v1698 = vrot.slane %v1691, %v1697
        %v1699 = vcombine.low %v1687, %v1688
        %v1701 = vunpack.c.l.s4 1983009808
        %v1702 = vunpack.c.0.s8 %v1701
        %v1703 = vlaneseq
        %v1704 = vshrl.u32 %v1703, 7
        %v1705 = vsub.s32 %v1702, %v1704
        %v1706 = vrot.slane %v1699, %v1705
        %v1707 = vcombine.low %v1679, %v1686
        %v1709 = vunpack.c.l.s4 1983009808
        %v1710 = vunpack.c.0.s8 %v1709
        %v1711 = vlaneseq
        %v1712 = vshrl.u32 %v1711, 7
        %v1713 = vsub.s32 %v1710, %v1712
        %v1714 = vrot.slane %v1707, %v1713
        %v1715 = vcombine.low %v1689, %v1690
        %v1717 = vunpack.c.l.s4 1983009808
        %v1718 = vunpack.c.0.s8 %v1717
        %v1719 = vlaneseq
        %v1720 = vshrl.u32 %v1719, 7
        %v1721 = vsub.s32 %v1718, %v1720
        %v1722 = vrot.slane %v1715, %v1721
        %v1723 = vcombine.low %v1698, %v1706
        %v1724 = vcombine.high %v1698, %v1706
        %v1726 = vunpack.c.l.s4 1934713408
        %v1727 = vunpack.c.0.s8 %v1726
        %v1728 = vlaneseq
        %v1729 = vshrl.u32 %v1728, 7
        %v1730 = vsub.s32 %v1727, %v1729
        %v1731 = vrot.slane %v1723, %v1730
        %v1733 = vunpack.c.l.s4 1934713408
        %v1734 = vunpack.c.0.s8 %v1733
        %v1735 = vlaneseq
        %v1736 = vshrl.u32 %v1735, 7
        %v1737 = vsub.s32 %v1734, %v1736
        %v1738 = vrot.slane %v1724, %v1737
        %v1739 = vcombine.low %v1714, %v1722
        %v1740 = vcombine.high %v1714, %v1722
        %v1742 = vunpack.c.l.s4 1934713408
        %v1743 = vunpack.c.0.s8 %v1742
        %v1744 = vlaneseq
        %v1745 = vshrl.u32 %v1744, 7
        %v1746 = vsub.s32 %v1743, %v1745
        %v1747 = vrot.slane %v1739, %v1746
        %v1749 = vunpack.c.l.s4 1934713408
        %v1750 = vunpack.c.0.s8 %v1749
        %v1751 = vlaneseq
        %v1752 = vshrl.u32 %v1751, 7
        %v1753 = vsub.s32 %v1750, %v1752
        %v1754 = vrot.slane %v1740, %v1753
        %v1755 = vcombine.low %v1731, %v1747
        %v1756 = vcombine.high %v1731, %v1747
        %v1757 = vcombine.low %v1738, %v1754
        %v1758 = vcombine.high %v1738, %v1754
        %1760 = vrot.lane.b32.xlu0 %v1756, 8
        %v1761 = vpop.permute.xlu0 %1760
        %1764 = vrot.lane.b32.xlu0 %v1757, 16
        %v1765 = vpop.permute.xlu0 %1764
        %1768 = vrot.lane.b32.xlu0 %v1758, 24
        %v1769 = vpop.permute.xlu0 %1768
        %v1771 = vsel %vm1205, %v1755, %v1761
        %vm1772 = vcmask 130048
        %v1773 = vsel %vm1772, %v1771, %v1765
        %vm1774 = vcmask 195584
        %v1775 = vsel %vm1774, %v1773, %v1769
        %v1776 = vpack.c.bf16 %v1775, %v1775
        %v1778 = vlaneseq
        %v1779 = vshrl.u32 %v1778, 7
        %v1780 = vsub.s32 0, %v1779
        %v1781 = vrot.slane %v620, %v1780
        %v1787 = vunpack.c.l.b16 %v627
        %v1788 = vunpack.c.l.b16 %v628
        %v1789 = vunpack.c.l.b16 %v629
        %v1790 = vunpack.c.l.b16 %v630
        %v1791 = vpack.c.b16 %v1788, %v1787
        %v1792 = vpack.c.b16 %v1790, %v1789
        %v1796 = vsel %vm652, %v1776, 0
        %1798 = vmatprep.subr.bf16.mxu0 0
        %1799 = vmatpush1.bf16.msra.mxu0 %v1791
        %1800 = vmatprep.subr.bf16.mxu0 0
        %1801 = vmatpush1.bf16.msra.mxu0 %v1792
        %1802 = vmatprep.subr.bf16.mxu0 0
        %1803 = vmatpush1.bf16.msra.mxu0 0
        %1804 = vmatprep.subr.bf16.mxu0 0
        %1805 = vmatpush1.bf16.msra.mxu0 0
        %1806 = vmatprep.subr.bf16.mxu0 0
        %1807 = vmatpush1.bf16.msra.mxu0 0
        %1808 = vmatprep.subr.bf16.mxu0 0
        %1809 = vmatpush1.bf16.msra.mxu0 0
        %1810 = vmatprep.subr.bf16.mxu0 0
        %1811 = vmatpush1.bf16.msra.mxu0 0
        %1812 = vmatprep.subr.bf16.mxu0 0
        %1813 = vmatpush1.bf16.msra.mxu0 0
        %1814 = vmatprep.subr.bf16.mxu0 0
        %1815 = vmatpush1.bf16.msra.mxu0 0
        %1816 = vmatprep.subr.bf16.mxu0 0
        %1817 = vmatpush1.bf16.msra.mxu0 0
        %1818 = vmatprep.subr.bf16.mxu0 0
        %1819 = vmatpush1.bf16.msra.mxu0 0
        %1820 = vmatprep.subr.bf16.mxu0 0
        %1821 = vmatpush1.bf16.msra.mxu0 0
        %1822 = vmatprep.subr.bf16.mxu0 0
        %1823 = vmatpush1.bf16.msra.mxu0 0
        %1824 = vmatprep.subr.bf16.mxu0 0
        %1825 = vmatpush1.bf16.msra.mxu0 0
        %1826 = vmatprep.subr.bf16.mxu0 0
        %1827 = vmatpush1.bf16.msra.mxu0 0
        %1828 = vmatprep.subr.bf16.mxu0 0
        %1829 = vmatpush1.bf16.msra.mxu0 0
        %1830 = vmatprep.mubr.bf16.mxu0 0
        %1831 = vmatmul.mubr.bf16.gmra.mrb[0].mxu0 %v1796
        %v1832 = vpop.f32.mrb[0].mxu0
        %v1833 = vadd.f32 %v1781, %v1832
        %v1834 = vpop.f32.mrb[0].mxu0
        %v1835 = vpop.f32.mrb[0].mxu0
        %v1836 = vpop.f32.mrb[0].mxu0
        %1837 = vdwg.mxu0
        %v1838 = vadd.f32 %v651, %v1833
        %v1839 = vsel %vm652, %v1838, 0.0
        %1840 = vadd.xlane.f32.xlu0 %v1839
        %v1841 = vpop.xlane.xlu0 %1840
        %v1842 = vmul.f32 %v1841, %v656
        %v1843 = vsub.f32 %v1838, %v1842
        %v1844 = vmul.f32 %v1843, %v1843
        %v1845 = vsel %vm652, %v1844, 0.0
        %1846 = vadd.xlane.f32.xlu0 %v1845
        %v1847 = vpop.xlane.xlu0 %1846
        %v1848 = vmul.f32 %v1847, %v656
        %v1849 = vadd.f32 %v1848, 1e-05
        %v1850 = vrsqrt.pop %v1849
        %v1851 = vmul.f32 %v1843, %v1850
        %v1853 = vlaneseq
        %v1854 = vshrl.u32 %v1853, 7
        %v1855 = vsub.s32 0, %v1854
        %v1856 = vrot.slane %v617, %v1855
        %v1858 = vmul.f32 %v1851, %v1856
        %v1860 = vlaneseq
        %v1861 = vshrl.u32 %v1860, 7
        %v1862 = vsub.s32 0, %v1861
        %v1863 = vrot.slane %v618, %v1862
        %v1865 = vadd.f32 %v1858, %v1863
        %v1866 = vpack.c.bf16 %v1865, %v1865
        %v1868 = vlaneseq
        %v1869 = vshrl.u32 %v1868, 7
        %v1870 = vsub.s32 0, %v1869
        %v1871 = vrot.slane %v621, %v1870
        %v1877 = vunpack.c.l.b16 %v631
        %v1878 = vunpack.c.l.b16 %v632
        %v1879 = vunpack.c.l.b16 %v633
        %v1880 = vunpack.c.l.b16 %v634
        %v1881 = vpack.c.b16 %v1878, %v1877
        %v1882 = vpack.c.b16 %v1880, %v1879
        %v1886 = vsel %vm652, %v1866, 0
        %1888 = vmatprep.subr.bf16.mxu0 0
        %1889 = vmatpush1.bf16.msra.mxu0 %v1881
        %1890 = vmatprep.subr.bf16.mxu0 0
        %1891 = vmatpush1.bf16.msra.mxu0 %v1882
        %1892 = vmatprep.subr.bf16.mxu0 0
        %1893 = vmatpush1.bf16.msra.mxu0 0
        %1894 = vmatprep.subr.bf16.mxu0 0
        %1895 = vmatpush1.bf16.msra.mxu0 0
        %1896 = vmatprep.subr.bf16.mxu0 0
        %1897 = vmatpush1.bf16.msra.mxu0 0
        %1898 = vmatprep.subr.bf16.mxu0 0
        %1899 = vmatpush1.bf16.msra.mxu0 0
        %1900 = vmatprep.subr.bf16.mxu0 0
        %1901 = vmatpush1.bf16.msra.mxu0 0
        %1902 = vmatprep.subr.bf16.mxu0 0
        %1903 = vmatpush1.bf16.msra.mxu0 0
        %1904 = vmatprep.subr.bf16.mxu0 0
        %1905 = vmatpush1.bf16.msra.mxu0 0
        %1906 = vmatprep.subr.bf16.mxu0 0
        %1907 = vmatpush1.bf16.msra.mxu0 0
        %1908 = vmatprep.subr.bf16.mxu0 0
        %1909 = vmatpush1.bf16.msra.mxu0 0
        %1910 = vmatprep.subr.bf16.mxu0 0
        %1911 = vmatpush1.bf16.msra.mxu0 0
        %1912 = vmatprep.subr.bf16.mxu0 0
        %1913 = vmatpush1.bf16.msra.mxu0 0
        %1914 = vmatprep.subr.bf16.mxu0 0
        %1915 = vmatpush1.bf16.msra.mxu0 0
        %1916 = vmatprep.subr.bf16.mxu0 0
        %1917 = vmatpush1.bf16.msra.mxu0 0
        %1918 = vmatprep.subr.bf16.mxu0 0
        %1919 = vmatpush1.bf16.msra.mxu0 0
        %1920 = vmatprep.mubr.bf16.mxu0 0
        %1921 = vmatmul.mubr.bf16.gmra.mrb[0].mxu0 %v1886
        %v1922 = vpop.f32.mrb[0].mxu0
        %v1923 = vadd.f32 %v1871, %v1922
        %v1924 = vpop.f32.mrb[0].mxu0
        %v1925 = vpop.f32.mrb[0].mxu0
        %v1926 = vpop.f32.mrb[0].mxu0
        %1927 = vdwg.mxu0
        %v1928 = vmax.f32 %v1923, 0.0
        %v1929 = vpack.c.bf16 %v1928, %v1928
        %v1931 = vlaneseq
        %v1932 = vshrl.u32 %v1931, 7
        %v1933 = vsub.s32 0, %v1932
        %v1934 = vrot.slane %v622, %v1933
        %v1952 = vunpack.c.l.b16 %v635
        %v1953 = vunpack.c.l.b16 %v636
        %v1954 = vunpack.c.l.b16 %v637
        %v1955 = vunpack.c.l.b16 %v638
        %v1956 = vunpack.c.l.b16 %v639
        %v1957 = vunpack.c.l.b16 %v640
        %v1958 = vunpack.c.l.b16 %v641
        %v1959 = vunpack.c.l.b16 %v642
        %v1960 = vunpack.c.l.b16 %v643
        %v1961 = vunpack.c.l.b16 %v644
        %v1962 = vunpack.c.l.b16 %v645
        %v1963 = vunpack.c.l.b16 %v646
        %v1964 = vunpack.c.l.b16 %v647
        %v1965 = vunpack.c.l.b16 %v648
        %v1966 = vunpack.c.l.b16 %v649
        %v1967 = vunpack.c.l.b16 %v650
        %v1968 = vpack.c.b16 %v1953, %v1952
        %v1969 = vpack.c.b16 %v1955, %v1954
        %v1970 = vpack.c.b16 %v1957, %v1956
        %v1971 = vpack.c.b16 %v1959, %v1958
        %v1972 = vpack.c.b16 %v1961, %v1960
        %v1973 = vpack.c.b16 %v1963, %v1962
        %v1974 = vpack.c.b16 %v1965, %v1964
        %v1975 = vpack.c.b16 %v1967, %v1966
        %1984 = vmatprep.subr.bf16.mxu0 0
        %1985 = vmatpush1.bf16.msra.mxu0 %v1968
        %1986 = vmatprep.subr.bf16.mxu0 0
        %1987 = vmatpush1.bf16.msra.mxu0 %v1969
        %1988 = vmatprep.subr.bf16.mxu0 0
        %1989 = vmatpush1.bf16.msra.mxu0 %v1970
        %1990 = vmatprep.subr.bf16.mxu0 0
        %1991 = vmatpush1.bf16.msra.mxu0 %v1971
        %1992 = vmatprep.subr.bf16.mxu0 0
        %1993 = vmatpush1.bf16.msra.mxu0 %v1972
        %1994 = vmatprep.subr.bf16.mxu0 0
        %1995 = vmatpush1.bf16.msra.mxu0 %v1973
        %1996 = vmatprep.subr.bf16.mxu0 0
        %1997 = vmatpush1.bf16.msra.mxu0 %v1974
        %1998 = vmatprep.subr.bf16.mxu0 0
        %1999 = vmatpush1.bf16.msra.mxu0 %v1975
        %2000 = vmatprep.subr.bf16.mxu0 0
        %2001 = vmatpush1.bf16.msra.mxu0 0
        %2002 = vmatprep.subr.bf16.mxu0 0
        %2003 = vmatpush1.bf16.msra.mxu0 0
        %2004 = vmatprep.subr.bf16.mxu0 0
        %2005 = vmatpush1.bf16.msra.mxu0 0
        %2006 = vmatprep.subr.bf16.mxu0 0
        %2007 = vmatpush1.bf16.msra.mxu0 0
        %2008 = vmatprep.subr.bf16.mxu0 0
        %2009 = vmatpush1.bf16.msra.mxu0 0
        %2010 = vmatprep.subr.bf16.mxu0 0
        %2011 = vmatpush1.bf16.msra.mxu0 0
        %2012 = vmatprep.subr.bf16.mxu0 0
        %2013 = vmatpush1.bf16.msra.mxu0 0
        %2014 = vmatprep.subr.bf16.mxu0 0
        %2015 = vmatpush1.bf16.msra.mxu0 0
        %2016 = vmatprep.mubr.bf16.mxu0 0
        %2017 = vmatmul.mubr.bf16.gmra.mrb[0].mxu0 %v1929
        %v2018 = vpop.f32.mrb[0].mxu0
        %v2019 = vadd.f32 %v1934, %v2018
        %v2020 = vpop.f32.mrb[0].mxu0
        %v2021 = vpop.f32.mrb[0].mxu0
        %v2022 = vpop.f32.mrb[0].mxu0
        %2023 = vdwg.mxu0
        %v2024 = vadd.f32 %v1838, %v2019
        %2025 = vst.msk [vmem:[%s613] sm:$0xff] %vm652, %v2024
        %s2026 = sand.u32 %s322, 1
        %s2027 = scalar_lea.sflag [#allocation4], %s2026
        %s2028 = sand.u32 %s322, 1
        %s2029 = smul.addr %s2028, 8
        %s2030 = scalar_lea.vmem [#allocation23], %s2029
        // Predicated region
        $region125: #{transformer_encoder_layer.1} parent=71 // pred_check
          %p2031 = pneg %p332
        $region126: #{transformer_encoder_layer.1} parent=71 // pred_check_branch
          %2033 = sbr.rel (%p2031) target = $region128
        $region127: #{transformer_encoder_layer.1} parent=71 // pred_region
          %s2035 = ssub.s32 128, 128
          %2036 = vsyncadd %s2027, %s2035
          %s2037 = smul.addr %s36, 128
          %s2038 = scalar_lea.hbm %s13, %s2037
          %s2040 = sshll.u32 %s2030, 4
          %s2041 = int_to_ptr.vmem [resolvable:$true] %s2040
          %2043 = dma.vmem_to_hbm [thread:$0]  %s2041, 128, %s2038, %s2027
        $region128: #{transformer_encoder_layer.1} parent=71 // pred_fallthru
          _
      $region72: #{transformer_encoder_layer.1} parent=5 // pred_fallthru
        _
      %p2044 = scmp.le.s32.totalorder 2, %s31
      // Predicated region
      $region129: #{transformer_encoder_layer.1} parent=5 // pred_check
        %p2045 = pneg %p2044
      $region130: #{transformer_encoder_layer.1} parent=5 // pred_check_branch
        %2047 = sbr.rel (%p2045) target = $region132
      $region131: #{transformer_encoder_layer.1} parent=5 // pred_region
        %s2048 = ssub.s32 %s31, 2
        // Predicated region
        $region133: #{transformer_encoder_layer.1} parent=131 // pred_check
          %p2049 = pneg %p338
        $region134: #{transformer_encoder_layer.1} parent=131 // pred_check_branch
          %2051 = sbr.rel (%p2049) target = $region136
        $region135: #{transformer_encoder_layer.1} parent=131 // pred_region
          %s2052 = sand.u32 %s323, 1
          %s2053 = scalar_lea.sflag [#allocation4], %s2052
          %s2054 = sand.u32 %s323, 1
          %s2055 = smul.addr %s2054, 8
          %s2056 = scalar_lea.vmem [#allocation23], %s2055
          %2057 = dma.done %s2053, 128
        $region136: #{transformer_encoder_layer.1} parent=131 // pred_fallthru
          _
      $region132: #{transformer_encoder_layer.1} parent=5 // pred_fallthru
        _
    $region6: #{transformer_encoder_layer.1} parent=1 // loop_footer
      %s35 = sadd.s32 1, %s31
    $region7: #{transformer_encoder_layer.1} parent=1 // loop_footer_branch
      %30 = sbr.rel target = $region3
    $region8: #{transformer_encoder_layer.1} parent=1 // loop_exit
      _
    %2058 = vsyncpa [#allocation3], 1
    %s2059 = scalar_lea.sflag [#allocation3], 1
    %2060 = vsyncpa %s2059, 1
    %2061 = vsyncpa [#allocation6], 1
    %2062 = vsyncpa [#allocation9], 1
    %2063 = vsyncpa [#allocation12], 1
    %2064 = vsyncpa [#allocation15], 1
    %2065 = vsyncpa [#allocation18], 1
    %2066 = vsyncpa [#allocation21], 1
    %2067 = vsyncpa [#allocation4], 1
    %s2068 = scalar_lea.sflag [#allocation4], 1
    %2069 = vsyncpa %s2068, 1

</llo_original>
